<compile_context>
chip_gen: v6e
topology: v6e:2x2x1
jax: 0.10.0
libtpu: 0.0.40
codegen_flags: <defaults>
</compile_context>

<pallas_src>
import functools

import numpy as np
import jax
import jax.numpy as jnp
from jax.experimental import pallas as pl
from jax.experimental.pallas import tpu as pltpu


# ---------------------------------------------------------------------------
# Host-side (one-time) weight preparation
# ---------------------------------------------------------------------------
def _matricize_conv3x3(w_hwio, W):
    """(3,3,Cin,Cout) conv weight -> (3*(W+2)*Cin, W*Cout) banded matrix.

    Row index = dy*(W+2)*Cin + wi*Cin + ci  (wi indexes the zero-padded row),
    Col index = wo*Cout + co,
    Entry     = w[dy, wi-wo, ci, co] when 0 <= wi-wo <= 2, else 0.
    Then  out_row[h] = concat_dy(xpad_row[h+dy]) @ M  is the 3x3 'same' conv.
    """
    w = np.asarray(w_hwio, dtype=np.float32)
    kH, kW, Cin, Cout = w.shape
    Wp = W + 2
    M = np.zeros((kH, Wp, Cin, W, Cout), np.float32)
    for dy in range(kH):
        for dx in range(kW):
            for wo in range(W):
                M[dy, wo + dx, :, wo, :] = w[dy, dx]
    return jnp.asarray(M.reshape(kH * Wp * Cin, W * Cout))


def prepare_params(params, *, H, W):
    """One-time host-side transform of PyTorch-style params into kernel form."""
    C = params["w1"].shape[-1]
    hidden = params["fc1_w"].shape[1]
    n_class = params["fc3_w"].shape[1]
    assert params["fc1_w"].shape[0] == C * H * W
    eps = 1e-5
    inv = params["bn_gamma"] / jnp.sqrt(params["bn_var"] + eps)
    bn_shift = params["bn_beta"] - params["bn_mean"] * inv
    # fc1 rows permuted from PyTorch (c,h,w) flatten order to our (h,w,c) order.
    fc1_w = params["fc1_w"].reshape(C, H, W, hidden)
    fc1_w = jnp.transpose(fc1_w, (1, 2, 0, 3)).reshape(H * W * C, hidden)
    return dict(
        w1m=_matricize_conv3x3(params["w1"], W).astype(jnp.bfloat16),
        w2m=_matricize_conv3x3(params["w2"], W).astype(jnp.bfloat16),
        b1=jnp.tile(params["b1"], W).reshape(1, W * C).astype(jnp.float32),
        b2=jnp.tile(params["b2"], W).reshape(1, W * C).astype(jnp.float32),
        bn_scale=jnp.tile(inv, W).reshape(1, W * C).astype(jnp.float32),
        bn_shift=jnp.tile(bn_shift, W).reshape(1, W * C).astype(jnp.float32),
        fc1_w=fc1_w.astype(jnp.bfloat16),
        fc1_b=params["fc1_b"].reshape(1, hidden).astype(jnp.float32),
        fc2_w=params["fc2_w"].astype(jnp.bfloat16),
        fc2_b=params["fc2_b"].reshape(1, hidden).astype(jnp.float32),
        fc3_w=params["fc3_w"].astype(jnp.bfloat16),
        fc3_b=params["fc3_b"].reshape(1, n_class).astype(jnp.float32),
    )


# ---------------------------------------------------------------------------
# Fused conv1 -> ReLU -> conv2 -> ReLU -> BN kernel (lane-dense row layout)
# ---------------------------------------------------------------------------
def _pad_same(x, halo_c):
    """(Nb, H, W*C) -> (Nb, H+2, (W+2)*C) with a zero halo (stays in VMEM)."""
    Nb, H, _ = x.shape
    zc = jnp.zeros((Nb, H, halo_c), x.dtype)
    rows = jnp.concatenate([zc, x, zc], axis=-1)
    zr = jnp.zeros((Nb, 1, rows.shape[-1]), x.dtype)
    return jnp.concatenate([zr, rows, zr], axis=1)


def _conv_rowmat(x_rows, wmat, *, H, C):
    """One 3x3 'same' conv as a single K = 3*(W+2)*C MXU matmul.

    x_rows: (Nb, H, W*C) f32.  wmat: (3*(W+2)*C, W*Cout) bf16.
    Returns (Nb*H, W*Cout) f32.
    """
    xp = _pad_same(x_rows, C)                                   # (Nb, H+2, (W+2)*C)
    Nb, _, WpC = xp.shape
    patch = jnp.concatenate([xp[:, dy:dy + H, :] for dy in range(3)], axis=-1)
    patch = patch.reshape(Nb * H, 3 * WpC).astype(wmat.dtype)   # lane-dense im2col rows
    return jnp.dot(patch, wmat, preferred_element_type=jnp.float32)


def _conv_block_kernel(x_ref, w1_ref, b1_ref, w2_ref, b2_ref, sc_ref, sh_ref,
                       o_ref, *, H, W, Cin, Cout):
    Nb = x_ref.shape[0]
    # Conv1 + bias + ReLU.
    h = _conv_rowmat(x_ref[...], w1_ref[...], H=H, C=Cin)        # (Nb*H, W*Cout)
    h = jnp.maximum(h + b1_ref[...], 0.0)
    # Conv2 + bias + ReLU + Dropout(eval=id) + BatchNorm(eval, folded).
    h = _conv_rowmat(h.reshape(Nb, H, W * Cout), w2_ref[...], H=H, C=Cout)
    h = jnp.maximum(h + b2_ref[...], 0.0)
    h = h * sc_ref[...] + sh_ref[...]
    o_ref[...] = h.reshape(Nb, H, W * Cout)                      # lane-dense store


def conv_stack(x_rows, prep, *, H, W, Cin, Cout):
    N = x_rows.shape[0]
    Wp = W + 2
    kernel = functools.partial(_conv_block_kernel, H=H, W=W, Cin=Cin, Cout=Cout)
    full2d = lambda n: (0, 0)
    return pl.pallas_call(
        kernel,
        out_shape=jax.ShapeDtypeStruct((N, H, W * Cout), jnp.float32),
        grid_spec=pltpu.PrefetchScalarGridSpec(
            num_scalar_prefetch=0,
            grid=(N,),
            in_specs=[
                pl.BlockSpec((1, H, W * Cin), lambda n: (n, 0, 0)),
                pl.BlockSpec((3 * Wp * Cin, W * Cout), full2d),
                pl.BlockSpec((1, W * Cout), full2d),
                pl.BlockSpec((3 * Wp * Cout, W * Cout), full2d),
                pl.BlockSpec((1, W * Cout), full2d),
                pl.BlockSpec((1, W * Cout), full2d),
                pl.BlockSpec((1, W * Cout), full2d),
            ],
            out_specs=pl.BlockSpec((1, H, W * Cout), lambda n: (n, 0, 0)),
        ),
        compiler_params=pltpu.CompilerParams(
            dimension_semantics=("parallel",)),
    )(x_rows, prep["w1m"], prep["b1"], prep["w2m"], prep["b2"],
      prep["bn_scale"], prep["bn_shift"])


# ---------------------------------------------------------------------------
# Fused fc1 -> ReLU -> fc2 -> ReLU -> fc3 kernel (K-tiled fc1 accumulation)
# ---------------------------------------------------------------------------
def _fc_stack_kernel(x_ref, w1_ref, b1_ref, w2_ref, b2_ref, w3_ref, b3_ref,
                     o_ref, acc_ref):
    k = pl.program_id(0)

    @pl.when(k == 0)
    def _():
        acc_ref[...] = jnp.zeros_like(acc_ref)

    # fc1 partial product for this K tile (weight DMA overlaps MXU compute).
    acc_ref[...] += jnp.dot(x_ref[...].astype(w1_ref.dtype), w1_ref[...],
                            preferred_element_type=jnp.float32)

    @pl.when(k == pl.num_programs(0) - 1)
    def _():
        h = jnp.maximum(acc_ref[...] + b1_ref[...], 0.0)
        h = jnp.dot(h.astype(w2_ref.dtype), w2_ref[...],
                    preferred_element_type=jnp.float32) + b2_ref[...]
        h = jnp.maximum(h, 0.0)
        out = jnp.dot(h.astype(w3_ref.dtype), w3_ref[...],
                      preferred_element_type=jnp.float32) + b3_ref[...]
        o_ref[...] = out.astype(o_ref.dtype)


def fc_stack(x, prep):
    M, K = x.shape
    hidden = prep["fc1_w"].shape[1]
    n_class = prep["fc3_w"].shape[1]
    tk = 512 if (K % 512 == 0) else K            # contraction tile (multiple of 128)
    full2d = lambda k: (0, 0)
    return pl.pallas_call(
        _fc_stack_kernel,
        out_shape=jax.ShapeDtypeStruct((M, n_class), jnp.float32),
        grid_spec=pltpu.PrefetchScalarGridSpec(
            num_scalar_prefetch=0,
            grid=(K // tk,),
            in_specs=[
                pl.BlockSpec((M, tk), lambda k: (0, k)),
                pl.BlockSpec((tk, hidden), lambda k: (k, 0)),
                pl.BlockSpec((1, hidden), full2d),
                pl.BlockSpec((hidden, hidden), full2d),
                pl.BlockSpec((1, hidden), full2d),
                pl.BlockSpec((hidden, n_class), full2d),
                pl.BlockSpec((1, n_class), full2d),
            ],
            out_specs=pl.BlockSpec((M, n_class), full2d),
            scratch_shapes=[pltpu.VMEM((M, hidden), jnp.float32)],
        ),
        compiler_params=pltpu.CompilerParams(
            dimension_semantics=("arbitrary",)),
    )(x, prep["fc1_w"], prep["fc1_b"], prep["fc2_w"], prep["fc2_b"],
      prep["fc3_w"], prep["fc3_b"])


# ---------------------------------------------------------------------------
# Full forward
# ---------------------------------------------------------------------------
def goat_mlp_forward(x_nchw, prep):
    N, C, H, W = x_nchw.shape
    # NCHW -> lane-dense (N, H, W*C) rows (the only activation transpose).
    x = jnp.transpose(x_nchw, (0, 2, 3, 1)).reshape(N, H, W * C)
    h = conv_stack(x, prep, H=H, W=W, Cin=C, Cout=C)             # (N, H, W*C)
    # Flatten is a plain reshape; the (c,h,w) permutation lives in fc1_w rows.
    h = h.reshape(N, H * W * C)
    # Pad MXU M-dim to >= 8 rows (padded rows are sliced away afterwards).
    Mp = max(8, N)
    if Mp > N:
        h = jnp.pad(h, ((0, Mp - N), (0, 0)))
    out = fc_stack(h, prep)
    return out[:N]


# ---------------------------------------------------------------------------
# Pure-XLA reference (same bf16-weight / f32-accumulation recipe)
# ---------------------------------------------------------------------------
def reference_forward(x_nchw, params):
    eps = 1e-5
    x = jnp.transpose(x_nchw, (0, 2, 3, 1))                      # NHWC

    def conv(h, w, b):
        y = jax.lax.conv_general_dilated(
            h.astype(jnp.bfloat16), w.astype(jnp.bfloat16),
            window_strides=(1, 1), padding="SAME",
            dimension_numbers=("NHWC", "HWIO", "NHWC"),
            preferred_element_type=jnp.float32)
        return jnp.maximum(y + b, 0.0)

    h = conv(x, params["w1"], params["b1"])
    h = conv(h, params["w2"], params["b2"])
    inv = params["bn_gamma"] / jnp.sqrt(params["bn_var"] + eps)
    h = h * inv + (params["bn_beta"] - params["bn_mean"] * inv)
    N, H, W, C = h.shape
    h = jnp.transpose(h, (0, 3, 1, 2)).reshape(N, C * H * W)     # PyTorch flatten

    def lin(h, w, b, relu):
        y = jnp.dot(h.astype(jnp.bfloat16), w.astype(jnp.bfloat16),
                    preferred_element_type=jnp.float32) + b
        return jnp.maximum(y, 0.0) if relu else y

    h = lin(h, params["fc1_w"], params["fc1_b"], True)
    h = lin(h, params["fc2_w"], params["fc2_b"], True)
    return lin(h, params["fc3_w"], params["fc3_b"], False)


# ---------------------------------------------------------------------------
if __name__ == "__main__":
    key = jax.random.PRNGKey(0)
    ks = jax.random.split(key, 8)

    # Small shapes consistent with the module: channels fixed at 32 by the
    # module; Linear input dim is C*H*W (25088 = 32*28*28 for mnist); here
    # C=32, H=W=8 -> dim = 2048, hidden=128, n_class=10.
    N, C, H, W = 2, 32, 8, 8
    hidden, n_class = 128, 10
    dim = C * H * W

    x = jax.random.normal(ks[0], (N, C, H, W), jnp.float32)

    params = dict(
        w1=jax.random.normal(ks[1], (3, 3, C, C), jnp.float32) * 0.05,
        b1=jax.random.normal(ks[2], (C,), jnp.float32) * 0.05,
        w2=jax.random.normal(ks[3], (3, 3, C, C), jnp.float32) * 0.05,
        b2=jax.random.normal(ks[4], (C,), jnp.float32) * 0.05,
        # BatchNorm2d(32) default init + fresh running stats (eval mode).
        bn_gamma=jnp.ones((C,), jnp.float32),
        bn_beta=jnp.zeros((C,), jnp.float32),
        bn_mean=jnp.zeros((C,), jnp.float32),
        bn_var=jnp.ones((C,), jnp.float32),
        fc1_w=jax.random.normal(ks[5], (dim, hidden), jnp.float32) * 0.1,
        fc1_b=jnp.zeros((hidden,), jnp.float32),
        fc2_w=jax.random.normal(ks[6], (hidden, hidden), jnp.float32) * 0.1,
        fc2_b=jnp.zeros((hidden,), jnp.float32),
        fc3_w=jax.random.normal(ks[7], (hidden, n_class), jnp.float32) * 0.1,
        fc3_b=jnp.zeros((n_class,), jnp.float32),
    )

    prep = prepare_params(params, H=H, W=W)       # one-time host-side prep
    out = jax.jit(goat_mlp_forward)(x, prep)
    jax.block_until_ready(out)
    assert out.shape == (N, n_class) and out.dtype == jnp.float32

    # Sanity check against the pure-XLA reference (same bf16 recipe, so only
    # f32 accumulation-order differences remain).
    ref = jax.jit(reference_forward)(x, params)
    np.testing.assert_allclose(np.asarray(out), np.asarray(ref),
                               rtol=2e-2, atol=2e-2)
    print("KERNEL_OK")
</pallas_src>

<mosaic_0001>
module attributes {stable_mosaic.version = 11 : i64} {
  func.func @_conv_block_kernel(%arg0: i32, %arg1: memref<1x8x256xf32, #tpu.memory_space<vmem>>, %arg2: memref<960x256xbf16, #tpu.memory_space<vmem>>, %arg3: memref<1x256xf32, #tpu.memory_space<vmem>>, %arg4: memref<960x256xbf16, #tpu.memory_space<vmem>>, %arg5: memref<1x256xf32, #tpu.memory_space<vmem>>, %arg6: memref<1x256xf32, #tpu.memory_space<vmem>>, %arg7: memref<1x256xf32, #tpu.memory_space<vmem>>, %arg8: memref<1x8x256xf32, #tpu.memory_space<vmem>>) attributes {dimension_semantics = [#tpu.dimension_semantics<parallel>], iteration_bounds = array<i64: 2>, scalar_prefetch = 0 : i64, scratch_operands = 0 : i64, tpu.core_type = #tpu.core_type<tc>, window_params = [{transform_indices = @transform_0, window_bounds = array<i64: 1, 8, 256>}, {pipeline_mode = #tpu.pipeline_mode<synchronous>, transform_indices = @transform_1, window_bounds = array<i64: 960, 256>}, {pipeline_mode = #tpu.pipeline_mode<synchronous>, transform_indices = @transform_2, window_bounds = array<i64: 1, 256>}, {pipeline_mode = #tpu.pipeline_mode<synchronous>, transform_indices = @transform_3, window_bounds = array<i64: 960, 256>}, {pipeline_mode = #tpu.pipeline_mode<synchronous>, transform_indices = @transform_4, window_bounds = array<i64: 1, 256>}, {pipeline_mode = #tpu.pipeline_mode<synchronous>, transform_indices = @transform_5, window_bounds = array<i64: 1, 256>}, {pipeline_mode = #tpu.pipeline_mode<synchronous>, transform_indices = @transform_6, window_bounds = array<i64: 1, 256>}, {transform_indices = @transform_7, window_bounds = array<i64: 1, 8, 256>}]} {
    %c0 = arith.constant 0 : index
    %c0_0 = arith.constant 0 : index
    %c0_1 = arith.constant 0 : index
    %0 = vector.load %arg1[%c0, %c0_0, %c0_1] : memref<1x8x256xf32, #tpu.memory_space<vmem>>, vector<1x8x256xf32>
    %c0_2 = arith.constant 0 : index
    %c0_3 = arith.constant 0 : index
    %1 = vector.load %arg2[%c0_2, %c0_3] : memref<960x256xbf16, #tpu.memory_space<vmem>>, vector<960x256xbf16>
    %cst = arith.constant 0.000000e+00 : f32
    %2 = vector.broadcast %cst : f32 to vector<1x8x32xf32>
    %3 = tpu.concatenate %2, %0, %2 in 2 : vector<1x8x32xf32>, vector<1x8x256xf32>, vector<1x8x32xf32> -> vector<1x8x320xf32>
    %cst_4 = arith.constant 0.000000e+00 : f32
    %4 = vector.broadcast %cst_4 : f32 to vector<1x1x320xf32>
    %5 = tpu.concatenate %4, %3, %4 in 1 : vector<1x1x320xf32>, vector<1x8x320xf32>, vector<1x1x320xf32> -> vector<1x10x320xf32>
    %6 = vector.extract_strided_slice %5 {offsets = [0, 0, 0], sizes = [1, 8, 320], strides = [1, 1, 1]} : vector<1x10x320xf32> to vector<1x8x320xf32>
    %7 = vector.extract_strided_slice %5 {offsets = [0, 1, 0], sizes = [1, 8, 320], strides = [1, 1, 1]} : vector<1x10x320xf32> to vector<1x8x320xf32>
    %8 = vector.extract_strided_slice %5 {offsets = [0, 2, 0], sizes = [1, 8, 320], strides = [1, 1, 1]} : vector<1x10x320xf32> to vector<1x8x320xf32>
    %9 = tpu.concatenate %6, %7, %8 in 2 : vector<1x8x320xf32>, vector<1x8x320xf32>, vector<1x8x320xf32> -> vector<1x8x960xf32>
    %10 = vector.shape_cast %9 : vector<1x8x960xf32> to vector<8x960xf32>
    %11 = arith.truncf %10 : vector<8x960xf32> to vector<8x960xbf16>
    %cst_5 = arith.constant dense<0.000000e+00> : vector<8x256xf32>
    %12 = tpu.matmul %11, %1, %cst_5 {dimension_numbers = #tpu.dot_dimension_numbers<[1], [0], [0], [1], [0, 0, 1, 1], [], []>} : vector<8x960xbf16>, vector<960x256xbf16>, vector<8x256xf32> -> vector<8x256xf32>
    %c0_6 = arith.constant 0 : index
    %c0_7 = arith.constant 0 : index
    %13 = vector.load %arg3[%c0_6, %c0_7] : memref<1x256xf32, #tpu.memory_space<vmem>>, vector<1x256xf32>
    %14 = vector.broadcast %13 : vector<1x256xf32> to vector<8x256xf32>
    %15 = arith.addf %12, %14 : vector<8x256xf32>
    %cst_8 = arith.constant 0.000000e+00 : f32
    %16 = vector.broadcast %cst_8 : f32 to vector<8x256xf32>
    %17 = arith.maximumf %15, %16 : vector<8x256xf32>
    %18 = vector.shape_cast %17 : vector<8x256xf32> to vector<1x8x256xf32>
    %c0_9 = arith.constant 0 : index
    %c0_10 = arith.constant 0 : index
    %19 = vector.load %arg4[%c0_9, %c0_10] : memref<960x256xbf16, #tpu.memory_space<vmem>>, vector<960x256xbf16>
    %cst_11 = arith.constant 0.000000e+00 : f32
    %20 = vector.broadcast %cst_11 : f32 to vector<1x8x32xf32>
    %21 = tpu.concatenate %20, %18, %20 in 2 : vector<1x8x32xf32>, vector<1x8x256xf32>, vector<1x8x32xf32> -> vector<1x8x320xf32>
    %cst_12 = arith.constant 0.000000e+00 : f32
    %22 = vector.broadcast %cst_12 : f32 to vector<1x1x320xf32>
    %23 = tpu.concatenate %22, %21, %22 in 1 : vector<1x1x320xf32>, vector<1x8x320xf32>, vector<1x1x320xf32> -> vector<1x10x320xf32>
    %24 = vector.extract_strided_slice %23 {offsets = [0, 0, 0], sizes = [1, 8, 320], strides = [1, 1, 1]} : vector<1x10x320xf32> to vector<1x8x320xf32>
    %25 = vector.extract_strided_slice %23 {offsets = [0, 1, 0], sizes = [1, 8, 320], strides = [1, 1, 1]} : vector<1x10x320xf32> to vector<1x8x320xf32>
    %26 = vector.extract_strided_slice %23 {offsets = [0, 2, 0], sizes = [1, 8, 320], strides = [1, 1, 1]} : vector<1x10x320xf32> to vector<1x8x320xf32>
    %27 = tpu.concatenate %24, %25, %26 in 2 : vector<1x8x320xf32>, vector<1x8x320xf32>, vector<1x8x320xf32> -> vector<1x8x960xf32>
    %28 = vector.shape_cast %27 : vector<1x8x960xf32> to vector<8x960xf32>
    %29 = arith.truncf %28 : vector<8x960xf32> to vector<8x960xbf16>
    %cst_13 = arith.constant dense<0.000000e+00> : vector<8x256xf32>
    %30 = tpu.matmul %29, %19, %cst_13 {dimension_numbers = #tpu.dot_dimension_numbers<[1], [0], [0], [1], [0, 0, 1, 1], [], []>} : vector<8x960xbf16>, vector<960x256xbf16>, vector<8x256xf32> -> vector<8x256xf32>
    %c0_14 = arith.constant 0 : index
    %c0_15 = arith.constant 0 : index
    %31 = vector.load %arg5[%c0_14, %c0_15] : memref<1x256xf32, #tpu.memory_space<vmem>>, vector<1x256xf32>
    %32 = vector.broadcast %31 : vector<1x256xf32> to vector<8x256xf32>
    %33 = arith.addf %30, %32 : vector<8x256xf32>
    %cst_16 = arith.constant 0.000000e+00 : f32
    %34 = vector.broadcast %cst_16 : f32 to vector<8x256xf32>
    %35 = arith.maximumf %33, %34 : vector<8x256xf32>
    %c0_17 = arith.constant 0 : index
    %c0_18 = arith.constant 0 : index
    %36 = vector.load %arg6[%c0_17, %c0_18] : memref<1x256xf32, #tpu.memory_space<vmem>>, vector<1x256xf32>
    %37 = vector.broadcast %36 : vector<1x256xf32> to vector<8x256xf32>
    %38 = arith.mulf %35, %37 : vector<8x256xf32>
    %c0_19 = arith.constant 0 : index
    %c0_20 = arith.constant 0 : index
    %39 = vector.load %arg7[%c0_19, %c0_20] : memref<1x256xf32, #tpu.memory_space<vmem>>, vector<1x256xf32>
    %40 = vector.broadcast %39 : vector<1x256xf32> to vector<8x256xf32>
    %41 = arith.addf %38, %40 : vector<8x256xf32>
    %42 = vector.shape_cast %41 : vector<8x256xf32> to vector<1x8x256xf32>
    %c0_21 = arith.constant 0 : index
    %c0_22 = arith.constant 0 : index
    %c0_23 = arith.constant 0 : index
    %43 = vector.load %arg8[%c0_21, %c0_22, %c0_23] : memref<1x8x256xf32, #tpu.memory_space<vmem>>, vector<1x8x256xf32>
    tpu.vector_store %arg8[%c0_21, %c0_22, %c0_23], %42 {strides = array<i32>} : memref<1x8x256xf32, #tpu.memory_space<vmem>>, vector<1x8x256xf32>,
    return
  }
  func.func @transform_0(%arg0: i32) -> (i32, i32, i32) {
    %c0_i32 = arith.constant 0 : i32
    %c0_i32_0 = arith.constant 0 : i32
    %c0_i32_1 = arith.constant 0 : i32
    return %arg0, %c0_i32, %c0_i32_0 : i32, i32, i32
  }
  func.func @transform_1(%arg0: i32) -> (i32, i32) {
    %c0_i32 = arith.constant 0 : i32
    %c0_i32_0 = arith.constant 0 : i32
    %c0_i32_1 = arith.constant 0 : i32
    return %c0_i32, %c0_i32_0 : i32, i32
  }
  func.func @transform_2(%arg0: i32) -> (i32, i32) {
    %c0_i32 = arith.constant 0 : i32
    %c0_i32_0 = arith.constant 0 : i32
    %c0_i32_1 = arith.constant 0 : i32
    return %c0_i32, %c0_i32_0 : i32, i32
  }
  func.func @transform_3(%arg0: i32) -> (i32, i32) {
    %c0_i32 = arith.constant 0 : i32
    %c0_i32_0 = arith.constant 0 : i32
    %c0_i32_1 = arith.constant 0 : i32
    return %c0_i32, %c0_i32_0 : i32, i32
  }
  func.func @transform_4(%arg0: i32) -> (i32, i32) {
    %c0_i32 = arith.constant 0 : i32
    %c0_i32_0 = arith.constant 0 : i32
    %c0_i32_1 = arith.constant 0 : i32
    return %c0_i32, %c0_i32_0 : i32, i32
  }
  func.func @transform_5(%arg0: i32) -> (i32, i32) {
    %c0_i32 = arith.constant 0 : i32
    %c0_i32_0 = arith.constant 0 : i32
    %c0_i32_1 = arith.constant 0 : i32
    return %c0_i32, %c0_i32_0 : i32, i32
  }
  func.func @transform_6(%arg0: i32) -> (i32, i32) {
    %c0_i32 = arith.constant 0 : i32
    %c0_i32_0 = arith.constant 0 : i32
    %c0_i32_1 = arith.constant 0 : i32
    return %c0_i32, %c0_i32_0 : i32, i32
  }
  func.func @transform_7(%arg0: i32) -> (i32, i32, i32) {
    %c0_i32 = arith.constant 0 : i32
    %c0_i32_0 = arith.constant 0 : i32
    %c0_i32_1 = arith.constant 0 : i32
    return %arg0, %c0_i32, %c0_i32_0 : i32, i32, i32
  }
}

module attributes {stable_mosaic.version = 11 : i64} {
  func.func @_fc_stack_kernel(%arg0: i32, %arg1: memref<8x512xf32, #tpu.memory_space<vmem>>, %arg2: memref<512x128xbf16, #tpu.memory_space<vmem>>, %arg3: memref<1x128xf32, #tpu.memory_space<vmem>>, %arg4: memref<128x128xbf16, #tpu.memory_space<vmem>>, %arg5: memref<1x128xf32, #tpu.memory_space<vmem>>, %arg6: memref<128x10xbf16, #tpu.memory_space<vmem>>, %arg7: memref<1x10xf32, #tpu.memory_space<vmem>>, %arg8: memref<8x10xf32, #tpu.memory_space<vmem>>, %arg9: memref<8x128xf32, #tpu.memory_space<vmem>>) attributes {dimension_semantics = [#tpu.dimension_semantics<arbitrary>], iteration_bounds = array<i64: 4>, scalar_prefetch = 0 : i64, scratch_operands = 1 : i64, tpu.core_type = #tpu.core_type<tc>, window_params = [{transform_indices = @transform_0, window_bounds = array<i64: 8, 512>}, {transform_indices = @transform_1, window_bounds = array<i64: 512, 128>}, {pipeline_mode = #tpu.pipeline_mode<synchronous>, transform_indices = @transform_2, window_bounds = array<i64: 1, 128>}, {pipeline_mode = #tpu.pipeline_mode<synchronous>, transform_indices = @transform_3, window_bounds = array<i64: 128, 128>}, {pipeline_mode = #tpu.pipeline_mode<synchronous>, transform_indices = @transform_4, window_bounds = array<i64: 1, 128>}, {pipeline_mode = #tpu.pipeline_mode<synchronous>, transform_indices = @transform_5, window_bounds = array<i64: 128, 10>}, {pipeline_mode = #tpu.pipeline_mode<synchronous>, transform_indices = @transform_6, window_bounds = array<i64: 1, 10>}, {pipeline_mode = #tpu.pipeline_mode<synchronous>, transform_indices = @transform_7, window_bounds = array<i64: 8, 10>}]} {
    %c0_i32 = arith.constant 0 : i32
    %0 = arith.cmpi eq, %arg0, %c0_i32 : i32
    %1 = arith.extui %0 : i1 to i32
    %c0_i32_0 = arith.constant 0 : i32
    %2 = arith.cmpi ne, %1, %c0_i32_0 : i32
    scf.if %2 {
      %cst_9 = arith.constant 0.000000e+00 : f32
      %13 = vector.broadcast %cst_9 : f32 to vector<8x128xf32>
      %c0_10 = arith.constant 0 : index
      %c0_11 = arith.constant 0 : index
      %14 = vector.load %arg9[%c0_10, %c0_11] : memref<8x128xf32, #tpu.memory_space<vmem>>, vector<8x128xf32>
      tpu.vector_store %arg9[%c0_10, %c0_11], %13 {strides = array<i32>} : memref<8x128xf32, #tpu.memory_space<vmem>>, vector<8x128xf32>,
    } else {
    }
    %c0 = arith.constant 0 : index
    %c0_1 = arith.constant 0 : index
    %3 = vector.load %arg9[%c0, %c0_1] : memref<8x128xf32, #tpu.memory_space<vmem>>, vector<8x128xf32>
    %c0_2 = arith.constant 0 : index
    %c0_3 = arith.constant 0 : index
    %4 = vector.load %arg1[%c0_2, %c0_3] : memref<8x512xf32, #tpu.memory_space<vmem>>, vector<8x512xf32>
    %5 = arith.truncf %4 : vector<8x512xf32> to vector<8x512xbf16>
    %c0_4 = arith.constant 0 : index
    %c0_5 = arith.constant 0 : index
    %6 = vector.load %arg2[%c0_4, %c0_5] : memref<512x128xbf16, #tpu.memory_space<vmem>>, vector<512x128xbf16>
    %cst = arith.constant dense<0.000000e+00> : vector<8x128xf32>
    %7 = tpu.matmul %5, %6, %cst {dimension_numbers = #tpu.dot_dimension_numbers<[1], [0], [0], [1], [0, 0, 1, 1], [], []>} : vector<8x512xbf16>, vector<512x128xbf16>, vector<8x128xf32> -> vector<8x128xf32>
    %8 = arith.addf %3, %7 : vector<8x128xf32>
    %c0_6 = arith.constant 0 : index
    %c0_7 = arith.constant 0 : index
    %9 = vector.load %arg9[%c0_6, %c0_7] : memref<8x128xf32, #tpu.memory_space<vmem>>, vector<8x128xf32>
    tpu.vector_store %arg9[%c0_6, %c0_7], %8 {strides = array<i32>} : memref<8x128xf32, #tpu.memory_space<vmem>>, vector<8x128xf32>,
    %c3_i32 = arith.constant 3 : i32
    %10 = arith.cmpi eq, %arg0, %c3_i32 : i32
    %11 = arith.extui %10 : i1 to i32
    %c0_i32_8 = arith.constant 0 : i32
    %12 = arith.cmpi ne, %11, %c0_i32_8 : i32
    scf.if %12 {
      %c0_9 = arith.constant 0 : index
      %c0_10 = arith.constant 0 : index
      %13 = vector.load %arg9[%c0_9, %c0_10] : memref<8x128xf32, #tpu.memory_space<vmem>>, vector<8x128xf32>
      %c0_11 = arith.constant 0 : index
      %c0_12 = arith.constant 0 : index
      %14 = vector.load %arg3[%c0_11, %c0_12] : memref<1x128xf32, #tpu.memory_space<vmem>>, vector<1x128xf32>
      %15 = vector.broadcast %14 : vector<1x128xf32> to vector<8x128xf32>
      %16 = arith.addf %13, %15 : vector<8x128xf32>
      %cst_13 = arith.constant 0.000000e+00 : f32
      %17 = vector.broadcast %cst_13 : f32 to vector<8x128xf32>
      %18 = arith.maximumf %16, %17 : vector<8x128xf32>
      %19 = arith.truncf %18 : vector<8x128xf32> to vector<8x128xbf16>
      %c0_14 = arith.constant 0 : index
      %c0_15 = arith.constant 0 : index
      %20 = vector.load %arg4[%c0_14, %c0_15] : memref<128x128xbf16, #tpu.memory_space<vmem>>, vector<128x128xbf16>
      %cst_16 = arith.constant dense<0.000000e+00> : vector<8x128xf32>
      %21 = tpu.matmul %19, %20, %cst_16 {dimension_numbers = #tpu.dot_dimension_numbers<[1], [0], [0], [1], [0, 0, 1, 1], [], []>} : vector<8x128xbf16>, vector<128x128xbf16>, vector<8x128xf32> -> vector<8x128xf32>
      %c0_17 = arith.constant 0 : index
      %c0_18 = arith.constant 0 : index
      %22 = vector.load %arg5[%c0_17, %c0_18] : memref<1x128xf32, #tpu.memory_space<vmem>>, vector<1x128xf32>
      %23 = vector.broadcast %22 : vector<1x128xf32> to vector<8x128xf32>
      %24 = arith.addf %21, %23 : vector<8x128xf32>
      %cst_19 = arith.constant 0.000000e+00 : f32
      %25 = vector.broadcast %cst_19 : f32 to vector<8x128xf32>
      %26 = arith.maximumf %24, %25 : vector<8x128xf32>
      %27 = arith.truncf %26 : vector<8x128xf32> to vector<8x128xbf16>
      %c0_20 = arith.constant 0 : index
      %c0_21 = arith.constant 0 : index
      %28 = vector.load %arg6[%c0_20, %c0_21] : memref<128x10xbf16, #tpu.memory_space<vmem>>, vector<128x10xbf16>
      %cst_22 = arith.constant dense<0.000000e+00> : vector<8x10xf32>
      %29 = tpu.matmul %27, %28, %cst_22 {dimension_numbers = #tpu.dot_dimension_numbers<[1], [0], [0], [1], [0, 0, 1, 1], [], []>} : vector<8x128xbf16>, vector<128x10xbf16>, vector<8x10xf32> -> vector<8x10xf32>
      %c0_23 = arith.constant 0 : index
      %c0_24 = arith.constant 0 : index
      %30 = vector.load %arg7[%c0_23, %c0_24] : memref<1x10xf32, #tpu.memory_space<vmem>>, vector<1x10xf32>
      %31 = vector.broadcast %30 : vector<1x10xf32> to vector<8x10xf32>
      %32 = arith.addf %29, %31 : vector<8x10xf32>
      %c0_25 = arith.constant 0 : index
      %c0_26 = arith.constant 0 : index
      %33 = vector.load %arg8[%c0_25, %c0_26] : memref<8x10xf32, #tpu.memory_space<vmem>>, vector<8x10xf32>
      tpu.vector_store %arg8[%c0_25, %c0_26], %32 {strides = array<i32>} : memref<8x10xf32, #tpu.memory_space<vmem>>, vector<8x10xf32>,
    } else {
    }
    return
  }
  func.func @transform_0(%arg0: i32) -> (i32, i32) {
    %c0_i32 = arith.constant 0 : i32
    %c0_i32_0 = arith.constant 0 : i32
    return %c0_i32, %arg0 : i32, i32
  }
  func.func @transform_1(%arg0: i32) -> (i32, i32) {
    %c0_i32 = arith.constant 0 : i32
    %c0_i32_0 = arith.constant 0 : i32
    return %arg0, %c0_i32 : i32, i32
  }
  func.func @transform_2(%arg0: i32) -> (i32, i32) {
    %c0_i32 = arith.constant 0 : i32
    %c0_i32_0 = arith.constant 0 : i32
    %c0_i32_1 = arith.constant 0 : i32
    return %c0_i32, %c0_i32_0 : i32, i32
  }
  func.func @transform_3(%arg0: i32) -> (i32, i32) {
    %c0_i32 = arith.constant 0 : i32
    %c0_i32_0 = arith.constant 0 : i32
    %c0_i32_1 = arith.constant 0 : i32
    return %c0_i32, %c0_i32_0 : i32, i32
  }
  func.func @transform_4(%arg0: i32) -> (i32, i32) {
    %c0_i32 = arith.constant 0 : i32
    %c0_i32_0 = arith.constant 0 : i32
    %c0_i32_1 = arith.constant 0 : i32
    return %c0_i32, %c0_i32_0 : i32, i32
  }
  func.func @transform_5(%arg0: i32) -> (i32, i32) {
    %c0_i32 = arith.constant 0 : i32
    %c0_i32_0 = arith.constant 0 : i32
    %c0_i32_1 = arith.constant 0 : i32
    return %c0_i32, %c0_i32_0 : i32, i32
  }
  func.func @transform_6(%arg0: i32) -> (i32, i32) {
    %c0_i32 = arith.constant 0 : i32
    %c0_i32_0 = arith.constant 0 : i32
    %c0_i32_1 = arith.constant 0 : i32
    return %c0_i32, %c0_i32_0 : i32, i32
  }
  func.func @transform_7(%arg0: i32) -> (i32, i32) {
    %c0_i32 = arith.constant 0 : i32
    %c0_i32_0 = arith.constant 0 : i32
    %c0_i32_1 = arith.constant 0 : i32
    return %c0_i32, %c0_i32_0 : i32, i32
  }
}

</mosaic_0001>

<llo_original>
// kernel: goat_mlp_forward.3
$region0: #{goat_mlp_forward.3}
  #allocation0 [shape = 'u32[]', space=smem, size = 0x4, offset = 0x4, fixed_abs, tag = 'smem constant byte address 0x4 - core index']
  #allocation1 [shape = 'u32[144,128]{1,0:T(1,128)}', space=vmem, size = 0x12000, scoped, tag = 'internal scratch']
  #allocation2 [shape = 'f32[8,128]{1,0:T(8,128)}', space=vmem, size = 0x1000, scoped, tag = 'scratch operand']
  %s0 = inlined_call_operand.vmem [shape: f32[8,2048], index: 0, kind: input, shape index: {}]
  %s1 = inlined_call_operand.vmem [shape: bf16[2048,128], index: 1, kind: input, shape index: {}]
  %s2 = inlined_call_operand.vmem [shape: f32[1,128], index: 2, kind: input, shape index: {}]
  %s3 = inlined_call_operand.vmem [shape: bf16[128,128], index: 3, kind: input, shape index: {}]
  %s4 = inlined_call_operand.vmem [shape: f32[1,128], index: 4, kind: input, shape index: {}]
  %s5 = inlined_call_operand.vmem [shape: bf16[128,10], index: 5, kind: input, shape index: {}]
  %s6 = inlined_call_operand.vmem [shape: f32[1,10], index: 6, kind: input, shape index: {}]
  %s7 = inlined_call_operand.vmem [shape: f32[8,10], index: 7, kind: output, shape index: {}]
  %s8 = sld [smem:[#allocation0]]
  $region69: #{goat_mlp_forward.3} parent=0
    _
  %s10 = ssub.s32 1, %s8
  %s11 = scalar_select 0, %s10, %s8
  loop: start=0, step=1, limit=6
  $region2: #{goat_mlp_forward.3} parent=0 // loop_pre_header
    _
  $region3: #{goat_mlp_forward.3} parent=0 // loop_header
    %s13 = sphi 0, %s17
    %p14 = scmp.ge.s32.totalorder %s13, 6
    %s23 = sphi 0, %s25
    %s26 = sphi 0, %s23
    %s27 = sphi 0, %s26
    %s43 = sphi 0, %s27
    %s49 = sphi 0, %s51
    %s52 = sphi 0, %s49
    %s53 = sphi 0, %s52
    %s69 = sphi 0, %s53
    %s73 = sphi 0, %s73
    %s75 = sphi 0, %s73
    %s76 = sphi 0, %s75
    %s90 = sphi 0, %s76
    %s94 = sphi 0, %s94
    %s96 = sphi 0, %s94
    %s97 = sphi 0, %s96
    %s111 = sphi 0, %s97
    %s115 = sphi 0, %s115
    %s117 = sphi 0, %s115
    %s118 = sphi 0, %s117
    %s132 = sphi 0, %s118
    %s136 = sphi 0, %s136
    %s138 = sphi 0, %s136
    %s139 = sphi 0, %s138
    %s153 = sphi 0, %s139
    %s157 = sphi 0, %s157
    %s159 = sphi 0, %s157
    %s160 = sphi 0, %s159
    %s174 = sphi 0, %s160
    %s178 = sphi 0, %s178
    %s180 = sphi 0, %s178
    %s181 = sphi 0, %s180
    %s195 = sphi 0, %s181
  $region4: #{goat_mlp_forward.3} parent=0 // loop_header_branch
    %16 = sbr.rel (%p14) target = $region8
  $region5: #{goat_mlp_forward.3} parent=0 // loop_body
    %s18 = ssub.s32 %s13, 1
    %s19 = ssub.s32 %s13, 2
    %s20 = sadd.s32 %s13, 1
    %s21 = ssub.s32 %s13, %s20
    %p22 = scmp.eq.s32.totalorder %s21, 0
    %s24 = sadd.s32 %s23, 1
    %s25 = scalar_select %p22, %s23, %s24
    %p28 = pneg %p22
    %p29 = scmp.eq.s32.totalorder %s13, 3
    %p30 = por %p28, %p29
    %p31 = scmp.ne.s32.totalorder %s23, %s26
    %p32 = scmp.eq.s32.totalorder %s13, 0
    %p33 = por %p31, %p32
    %p34 = scmp.ne.s32.totalorder %s23, %s26
    %p35 = scmp.eq.s32.totalorder %s18, 3
    %p36 = por %p34, %p35
    %p37 = scmp.ne.s32.totalorder %s26, %s27
    %p38 = scmp.eq.s32.totalorder %s18, 0
    %p39 = por %p37, %p38
    %p40 = scmp.ne.s32.totalorder %s26, %s27
    %p41 = scmp.eq.s32.totalorder %s19, 3
    %p42 = por %p40, %p41
    %p44 = scmp.ne.s32.totalorder %s27, %s43
    %p45 = scmp.eq.s32.totalorder %s19, 0
    %p46 = por %p44, %p45
    %s47 = ssub.s32 %s13, %s20
    %p48 = scmp.eq.s32.totalorder %s47, 0
    %s50 = sadd.s32 %s49, 1
    %s51 = scalar_select %p48, %s49, %s50
    %p54 = pneg %p48
    %p55 = scmp.eq.s32.totalorder %s13, 3
    %p56 = por %p54, %p55
    %p57 = scmp.ne.s32.totalorder %s49, %s52
    %p58 = scmp.eq.s32.totalorder %s13, 0
    %p59 = por %p57, %p58
    %p60 = scmp.ne.s32.totalorder %s49, %s52
    %p61 = scmp.eq.s32.totalorder %s18, 3
    %p62 = por %p60, %p61
    %p63 = scmp.ne.s32.totalorder %s52, %s53
    %p64 = scmp.eq.s32.totalorder %s18, 0
    %p65 = por %p63, %p64
    %p66 = scmp.ne.s32.totalorder %s52, %s53
    %p67 = scmp.eq.s32.totalorder %s19, 3
    %p68 = por %p66, %p67
    %p70 = scmp.ne.s32.totalorder %s53, %s69
    %p71 = scmp.eq.s32.totalorder %s19, 0
    %p72 = por %p70, %p71
    %s74 = sadd.s32 %s73, 1
    %p77 = scmp.eq.s32.totalorder %s13, 3
    %p78 = scmp.ne.s32.totalorder %s73, %s75
    %p79 = scmp.eq.s32.totalorder %s13, 0
    %p80 = por %p78, %p79
    %p81 = scmp.ne.s32.totalorder %s73, %s75
    %p82 = scmp.eq.s32.totalorder %s18, 3
    %p83 = por %p81, %p82
    %p84 = scmp.ne.s32.totalorder %s75, %s76
    %p85 = scmp.eq.s32.totalorder %s18, 0
    %p86 = por %p84, %p85
    %p87 = scmp.ne.s32.totalorder %s75, %s76
    %p88 = scmp.eq.s32.totalorder %s19, 3
    %p89 = por %p87, %p88
    %p91 = scmp.ne.s32.totalorder %s76, %s90
    %p92 = scmp.eq.s32.totalorder %s19, 0
    %p93 = por %p91, %p92
    %s95 = sadd.s32 %s94, 1
    %p98 = scmp.eq.s32.totalorder %s13, 3
    %p99 = scmp.ne.s32.totalorder %s94, %s96
    %p100 = scmp.eq.s32.totalorder %s13, 0
    %p101 = por %p99, %p100
    %p102 = scmp.ne.s32.totalorder %s94, %s96
    %p103 = scmp.eq.s32.totalorder %s18, 3
    %p104 = por %p102, %p103
    %p105 = scmp.ne.s32.totalorder %s96, %s97
    %p106 = scmp.eq.s32.totalorder %s18, 0
    %p107 = por %p105, %p106
    %p108 = scmp.ne.s32.totalorder %s96, %s97
    %p109 = scmp.eq.s32.totalorder %s19, 3
    %p110 = por %p108, %p109
    %p112 = scmp.ne.s32.totalorder %s97, %s111
    %p113 = scmp.eq.s32.totalorder %s19, 0
    %p114 = por %p112, %p113
    %s116 = sadd.s32 %s115, 1
    %p119 = scmp.eq.s32.totalorder %s13, 3
    %p120 = scmp.ne.s32.totalorder %s115, %s117
    %p121 = scmp.eq.s32.totalorder %s13, 0
    %p122 = por %p120, %p121
    %p123 = scmp.ne.s32.totalorder %s115, %s117
    %p124 = scmp.eq.s32.totalorder %s18, 3
    %p125 = por %p123, %p124
    %p126 = scmp.ne.s32.totalorder %s117, %s118
    %p127 = scmp.eq.s32.totalorder %s18, 0
    %p128 = por %p126, %p127
    %p129 = scmp.ne.s32.totalorder %s117, %s118
    %p130 = scmp.eq.s32.totalorder %s19, 3
    %p131 = por %p129, %p130
    %p133 = scmp.ne.s32.totalorder %s118, %s132
    %p134 = scmp.eq.s32.totalorder %s19, 0
    %p135 = por %p133, %p134
    %s137 = sadd.s32 %s136, 1
    %p140 = scmp.eq.s32.totalorder %s13, 3
    %p141 = scmp.ne.s32.totalorder %s136, %s138
    %p142 = scmp.eq.s32.totalorder %s13, 0
    %p143 = por %p141, %p142
    %p144 = scmp.ne.s32.totalorder %s136, %s138
    %p145 = scmp.eq.s32.totalorder %s18, 3
    %p146 = por %p144, %p145
    %p147 = scmp.ne.s32.totalorder %s138, %s139
    %p148 = scmp.eq.s32.totalorder %s18, 0
    %p149 = por %p147, %p148
    %p150 = scmp.ne.s32.totalorder %s138, %s139
    %p151 = scmp.eq.s32.totalorder %s19, 3
    %p152 = por %p150, %p151
    %p154 = scmp.ne.s32.totalorder %s139, %s153
    %p155 = scmp.eq.s32.totalorder %s19, 0
    %p156 = por %p154, %p155
    %s158 = sadd.s32 %s157, 1
    %p161 = scmp.eq.s32.totalorder %s13, 3
    %p162 = scmp.ne.s32.totalorder %s157, %s159
    %p163 = scmp.eq.s32.totalorder %s13, 0
    %p164 = por %p162, %p163
    %p165 = scmp.ne.s32.totalorder %s157, %s159
    %p166 = scmp.eq.s32.totalorder %s18, 3
    %p167 = por %p165, %p166
    %p168 = scmp.ne.s32.totalorder %s159, %s160
    %p169 = scmp.eq.s32.totalorder %s18, 0
    %p170 = por %p168, %p169
    %p171 = scmp.ne.s32.totalorder %s159, %s160
    %p172 = scmp.eq.s32.totalorder %s19, 3
    %p173 = por %p171, %p172
    %p175 = scmp.ne.s32.totalorder %s160, %s174
    %p176 = scmp.eq.s32.totalorder %s19, 0
    %p177 = por %p175, %p176
    %s179 = sadd.s32 %s178, 1
    %p182 = scmp.eq.s32.totalorder %s13, 3
    %p183 = scmp.ne.s32.totalorder %s178, %s180
    %p184 = scmp.eq.s32.totalorder %s13, 0
    %p185 = por %p183, %p184
    %p186 = scmp.ne.s32.totalorder %s178, %s180
    %p187 = scmp.eq.s32.totalorder %s18, 3
    %p188 = por %p186, %p187
    %p189 = scmp.ne.s32.totalorder %s180, %s181
    %p190 = scmp.eq.s32.totalorder %s18, 0
    %p191 = por %p189, %p190
    %p192 = scmp.ne.s32.totalorder %s180, %s181
    %p193 = scmp.eq.s32.totalorder %s19, 3
    %p194 = por %p192, %p193
    %p196 = scmp.ne.s32.totalorder %s181, %s195
    %p197 = scmp.eq.s32.totalorder %s19, 0
    %p198 = por %p196, %p197
    %p199 = scmp.le.s32.totalorder 1, %s13
    %p200 = scmp.lt.s32.totalorder %s13, 5
    %p201 = pnand %p199, %p200
    %p202 = pneg %p201
    // Predicated region
    $region9: #{goat_mlp_forward.3} parent=5 // pred_check
      _
    $region10: #{goat_mlp_forward.3} parent=5 // pred_check_branch
      %204 = sbr.rel (%p201) target = $region12
    $region11: #{goat_mlp_forward.3} parent=5 // pred_region
      %s205 = ssub.s32 %s13, 1
      // Predicated region
      $region13: #{goat_mlp_forward.3} parent=11 // pred_check
        %p206 = pneg %p86
      $region14: #{goat_mlp_forward.3} parent=11 // pred_check_branch
        %208 = sbr.rel (%p206) target = $region16
      $region15: #{goat_mlp_forward.3} parent=11 // pred_region
        _
      $region16: #{goat_mlp_forward.3} parent=11 // pred_fallthru
        _
      // Predicated region
      $region17: #{goat_mlp_forward.3} parent=11 // pred_check
        %p209 = pneg %p107
      $region18: #{goat_mlp_forward.3} parent=11 // pred_check_branch
        %211 = sbr.rel (%p209) target = $region20
      $region19: #{goat_mlp_forward.3} parent=11 // pred_region
        _
      $region20: #{goat_mlp_forward.3} parent=11 // pred_fallthru
        _
      // Predicated region
      $region21: #{goat_mlp_forward.3} parent=11 // pred_check
        %p212 = pneg %p128
      $region22: #{goat_mlp_forward.3} parent=11 // pred_check_branch
        %214 = sbr.rel (%p212) target = $region24
      $region23: #{goat_mlp_forward.3} parent=11 // pred_region
        _
      $region24: #{goat_mlp_forward.3} parent=11 // pred_fallthru
        _
      // Predicated region
      $region25: #{goat_mlp_forward.3} parent=11 // pred_check
        %p215 = pneg %p149
      $region26: #{goat_mlp_forward.3} parent=11 // pred_check_branch
        %217 = sbr.rel (%p215) target = $region28
      $region27: #{goat_mlp_forward.3} parent=11 // pred_region
        _
      $region28: #{goat_mlp_forward.3} parent=11 // pred_fallthru
        _
      // Predicated region
      $region29: #{goat_mlp_forward.3} parent=11 // pred_check
        %p218 = pneg %p170
      $region30: #{goat_mlp_forward.3} parent=11 // pred_check_branch
        %220 = sbr.rel (%p218) target = $region32
      $region31: #{goat_mlp_forward.3} parent=11 // pred_region
        _
      $region32: #{goat_mlp_forward.3} parent=11 // pred_fallthru
        _
    $region12: #{goat_mlp_forward.3} parent=5 // pred_fallthru
      _
    %p221 = scmp.lt.s32.totalorder %s13, 4
    // Predicated region
    $region33: #{goat_mlp_forward.3} parent=5 // pred_check
      %p222 = pneg %p221
    $region34: #{goat_mlp_forward.3} parent=5 // pred_check_branch
      %224 = sbr.rel (%p222) target = $region36
    $region35: #{goat_mlp_forward.3} parent=5 // pred_region
      // Predicated region
      $region37: #{goat_mlp_forward.3} parent=35 // pred_check
        %p225 = pneg %p33
      $region38: #{goat_mlp_forward.3} parent=35 // pred_check_branch
        %227 = sbr.rel (%p225) target = $region40
      $region39: #{goat_mlp_forward.3} parent=35 // pred_region
        %s228 = smul.u32 4, %s13
        %p229 = scmp.lt.s32.totalorder %s228, 15
        %s230 = scalar_select %p229, %s228, 15
        %s231 = smul.addr %s230, 8
        %s232 = scalar_lea.vmem %s0, %s231
        %s233 = smul.u32 4, %s13
      $region40: #{goat_mlp_forward.3} parent=35 // pred_fallthru
        _
      // Predicated region
      $region41: #{goat_mlp_forward.3} parent=35 // pred_check
        %p234 = pneg %p59
      $region42: #{goat_mlp_forward.3} parent=35 // pred_check_branch
        %236 = sbr.rel (%p234) target = $region44
      $region43: #{goat_mlp_forward.3} parent=35 // pred_region
        %s237 = smul.u32 64, %s13
        %p238 = scmp.lt.s32.totalorder %s237, 255
        %s239 = scalar_select %p238, %s237, 255
        %s240 = smul.addr %s239, 4
        %s241 = scalar_lea.vmem %s1, %s240
        %s242 = smul.u32 64, %s13
      $region44: #{goat_mlp_forward.3} parent=35 // pred_fallthru
        _
    $region36: #{goat_mlp_forward.3} parent=5 // pred_fallthru
      _
    %p243 = scmp.le.s32.totalorder 1, %s13
    %p244 = scmp.lt.s32.totalorder %s13, 5
    %p245 = pnand %p243, %p244
    %p246 = pneg %p245
    // Predicated region
    $region45: #{goat_mlp_forward.3} parent=5 // pred_check
      _
    $region46: #{goat_mlp_forward.3} parent=5 // pred_check_branch
      %248 = sbr.rel (%p245) target = $region48
    $region47: #{goat_mlp_forward.3} parent=5 // pred_region
      %s249 = ssub.s32 %s13, 1
      %s250 = smul.u32 4, %s18
      %p251 = scmp.lt.s32.totalorder %s250, 15
      %s252 = scalar_select %p251, %s250, 15
      %s253 = smul.addr %s252, 8
      %s254 = scalar_lea.vmem %s0, %s253
      %p255 = pneg %p39
      %p256 = pneg %p36
      %s257 = smul.u32 64, %s18
      %p258 = scmp.lt.s32.totalorder %s257, 255
      %s259 = scalar_select %p258, %s257, 255
      %s260 = smul.addr %s259, 4
      %s261 = scalar_lea.vmem %s1, %s260
      %p262 = pneg %p65
      %p263 = pneg %p62
      %p264 = pneg %p86
      %p265 = pneg %p83
      %p266 = pneg %p107
      %p267 = pneg %p104
      %p268 = pneg %p128
      %p269 = pneg %p125
      %p270 = pneg %p149
      %p271 = pneg %p146
      %p272 = pneg %p170
      %p273 = pneg %p167
      %p274 = pneg %p191
      %p275 = pneg %p188
      %s276 = smul.u32 4, %s18
      %p277 = scmp.lt.s32.totalorder %s276, 15
      %s278 = scalar_select %p277, %s276, 15
      %s279 = smul.addr %s278, 8
      %s280 = scalar_lea.vmem %s0, %s279
      %s281 = smul.u32 4, %s18
      %s282 = smul.u32 64, %s18
      %p283 = scmp.lt.s32.totalorder %s282, 255
      %s284 = scalar_select %p283, %s282, 255
      %s285 = smul.addr %s284, 4
      %s286 = scalar_lea.vmem %s1, %s285
      %s287 = smul.u32 64, %s18
      %p289 = scmp.eq.s32.totalorder %s18, 0
      // Predicated region
      $region49: #{goat_mlp_forward.3} parent=47 // pred_check
        %p290 = pneg %p289
      $region50: #{goat_mlp_forward.3} parent=47 // pred_check_branch
        %292 = sbr.rel (%p290) target = $region52
      $region51: #{goat_mlp_forward.3} parent=47 // pred_region
        %293 = vst [vmem:[#allocation2] sm:$0xff] 0.0
      $region52: #{goat_mlp_forward.3} parent=47 // pred_fallthru
        _
      %v294 = vld [vmem:[#allocation2] sm:$0xff]
      %v295 = vld [vmem:[%s280] sm:$0xff]
      %v296 = vld [vmem:[%s280 + $0x8] sm:$0xff]
      %v297 = vld [vmem:[%s280 + $0x10] sm:$0xff]
      %v298 = vld [vmem:[%s280 + $0x18] sm:$0xff]
      %v299 = vpack.c.bf16 %v295, %v295
      %v300 = vpack.c.bf16 %v296, %v296
      %v301 = vpack.c.bf16 %v297, %v297
      %v302 = vpack.c.bf16 %v298, %v298
      %v303 = vld [vmem:[%s286] sm:$0xf]
      %v304 = vld [vmem:[%s286 + $0x4] sm:$0xf]
      %v305 = vld [vmem:[%s286 + $0x8] sm:$0xf]
      %v306 = vld [vmem:[%s286 + $0xc] sm:$0xf]
      %v307 = vld [vmem:[%s286 + $0x10] sm:$0xf]
      %v308 = vld [vmem:[%s286 + $0x14] sm:$0xf]
      %v309 = vld [vmem:[%s286 + $0x18] sm:$0xf]
      %v310 = vld [vmem:[%s286 + $0x1c] sm:$0xf]
      %v311 = vld [vmem:[%s286 + $0x20] sm:$0xf]
      %v312 = vld [vmem:[%s286 + $0x24] sm:$0xf]
      %v313 = vld [vmem:[%s286 + $0x28] sm:$0xf]
      %v314 = vld [vmem:[%s286 + $0x2c] sm:$0xf]
      %v315 = vld [vmem:[%s286 + $0x30] sm:$0xf]
      %v316 = vld [vmem:[%s286 + $0x34] sm:$0xf]
      %v317 = vld [vmem:[%s286 + $0x38] sm:$0xf]
      %v318 = vld [vmem:[%s286 + $0x3c] sm:$0xf]
      %v319 = vld [vmem:[%s286 + $0x40] sm:$0xf]
      %v320 = vld [vmem:[%s286 + $0x44] sm:$0xf]
      %v321 = vld [vmem:[%s286 + $0x48] sm:$0xf]
      %v322 = vld [vmem:[%s286 + $0x4c] sm:$0xf]
      %v323 = vld [vmem:[%s286 + $0x50] sm:$0xf]
      %v324 = vld [vmem:[%s286 + $0x54] sm:$0xf]
      %v325 = vld [vmem:[%s286 + $0x58] sm:$0xf]
      %v326 = vld [vmem:[%s286 + $0x5c] sm:$0xf]
      %v327 = vld [vmem:[%s286 + $0x60] sm:$0xf]
      %v328 = vld [vmem:[%s286 + $0x64] sm:$0xf]
      %v329 = vld [vmem:[%s286 + $0x68] sm:$0xf]
      %v330 = vld [vmem:[%s286 + $0x6c] sm:$0xf]
      %v331 = vld [vmem:[%s286 + $0x70] sm:$0xf]
      %v332 = vld [vmem:[%s286 + $0x74] sm:$0xf]
      %v333 = vld [vmem:[%s286 + $0x78] sm:$0xf]
      %v334 = vld [vmem:[%s286 + $0x7c] sm:$0xf]
      %v335 = vld [vmem:[%s286 + $0x80] sm:$0xf]
      %v336 = vld [vmem:[%s286 + $0x84] sm:$0xf]
      %v337 = vld [vmem:[%s286 + $0x88] sm:$0xf]
      %v338 = vld [vmem:[%s286 + $0x8c] sm:$0xf]
      %v339 = vld [vmem:[%s286 + $0x90] sm:$0xf]
      %v340 = vld [vmem:[%s286 + $0x94] sm:$0xf]
      %v341 = vld [vmem:[%s286 + $0x98] sm:$0xf]
      %v342 = vld [vmem:[%s286 + $0x9c] sm:$0xf]
      %v343 = vld [vmem:[%s286 + $0xa0] sm:$0xf]
      %v344 = vld [vmem:[%s286 + $0xa4] sm:$0xf]
      %v345 = vld [vmem:[%s286 + $0xa8] sm:$0xf]
      %v346 = vld [vmem:[%s286 + $0xac] sm:$0xf]
      %v347 = vld [vmem:[%s286 + $0xb0] sm:$0xf]
      %v348 = vld [vmem:[%s286 + $0xb4] sm:$0xf]
      %v349 = vld [vmem:[%s286 + $0xb8] sm:$0xf]
      %v350 = vld [vmem:[%s286 + $0xbc] sm:$0xf]
      %v351 = vld [vmem:[%s286 + $0xc0] sm:$0xf]
      %v352 = vld [vmem:[%s286 + $0xc4] sm:$0xf]
      %v353 = vld [vmem:[%s286 + $0xc8] sm:$0xf]
      %v354 = vld [vmem:[%s286 + $0xcc] sm:$0xf]
      %v355 = vld [vmem:[%s286 + $0xd0] sm:$0xf]
      %v356 = vld [vmem:[%s286 + $0xd4] sm:$0xf]
      %v357 = vld [vmem:[%s286 + $0xd8] sm:$0xf]
      %v358 = vld [vmem:[%s286 + $0xdc] sm:$0xf]
      %v359 = vld [vmem:[%s286 + $0xe0] sm:$0xf]
      %v360 = vld [vmem:[%s286 + $0xe4] sm:$0xf]
      %v361 = vld [vmem:[%s286 + $0xe8] sm:$0xf]
      %v362 = vld [vmem:[%s286 + $0xec] sm:$0xf]
      %v363 = vld [vmem:[%s286 + $0xf0] sm:$0xf]
      %v364 = vld [vmem:[%s286 + $0xf4] sm:$0xf]
      %v365 = vld [vmem:[%s286 + $0xf8] sm:$0xf]
      %v366 = vld [vmem:[%s286 + $0xfc] sm:$0xf]
      %v431 = vunpack.c.l.b16 %v303
      %v432 = vunpack.c.l.b16 %v304
      %v433 = vunpack.c.l.b16 %v305
      %v434 = vunpack.c.l.b16 %v306
      %v435 = vunpack.c.l.b16 %v307
      %v436 = vunpack.c.l.b16 %v308
      %v437 = vunpack.c.l.b16 %v309
      %v438 = vunpack.c.l.b16 %v310
      %v439 = vunpack.c.l.b16 %v311
      %v440 = vunpack.c.l.b16 %v312
      %v441 = vunpack.c.l.b16 %v313
      %v442 = vunpack.c.l.b16 %v314
      %v443 = vunpack.c.l.b16 %v315
      %v444 = vunpack.c.l.b16 %v316
      %v445 = vunpack.c.l.b16 %v317
      %v446 = vunpack.c.l.b16 %v318
      %v447 = vunpack.c.l.b16 %v319
      %v448 = vunpack.c.l.b16 %v320
      %v449 = vunpack.c.l.b16 %v321
      %v450 = vunpack.c.l.b16 %v322
      %v451 = vunpack.c.l.b16 %v323
      %v452 = vunpack.c.l.b16 %v324
      %v453 = vunpack.c.l.b16 %v325
      %v454 = vunpack.c.l.b16 %v326
      %v455 = vunpack.c.l.b16 %v327
      %v456 = vunpack.c.l.b16 %v328
      %v457 = vunpack.c.l.b16 %v329
      %v458 = vunpack.c.l.b16 %v330
      %v459 = vunpack.c.l.b16 %v331
      %v460 = vunpack.c.l.b16 %v332
      %v461 = vunpack.c.l.b16 %v333
      %v462 = vunpack.c.l.b16 %v334
      %v463 = vunpack.c.l.b16 %v335
      %v464 = vunpack.c.l.b16 %v336
      %v465 = vunpack.c.l.b16 %v337
      %v466 = vunpack.c.l.b16 %v338
      %v467 = vunpack.c.l.b16 %v339
      %v468 = vunpack.c.l.b16 %v340
      %v469 = vunpack.c.l.b16 %v341
      %v470 = vunpack.c.l.b16 %v342
      %v471 = vunpack.c.l.b16 %v343
      %v472 = vunpack.c.l.b16 %v344
      %v473 = vunpack.c.l.b16 %v345
      %v474 = vunpack.c.l.b16 %v346
      %v475 = vunpack.c.l.b16 %v347
      %v476 = vunpack.c.l.b16 %v348
      %v477 = vunpack.c.l.b16 %v349
      %v478 = vunpack.c.l.b16 %v350
      %v479 = vunpack.c.l.b16 %v351
      %v480 = vunpack.c.l.b16 %v352
      %v481 = vunpack.c.l.b16 %v353
      %v482 = vunpack.c.l.b16 %v354
      %v483 = vunpack.c.l.b16 %v355
      %v484 = vunpack.c.l.b16 %v356
      %v485 = vunpack.c.l.b16 %v357
      %v486 = vunpack.c.l.b16 %v358
      %v487 = vunpack.c.l.b16 %v359
      %v488 = vunpack.c.l.b16 %v360
      %v489 = vunpack.c.l.b16 %v361
      %v490 = vunpack.c.l.b16 %v362
      %v491 = vunpack.c.l.b16 %v363
      %v492 = vunpack.c.l.b16 %v364
      %v493 = vunpack.c.l.b16 %v365
      %v494 = vunpack.c.l.b16 %v366
      %v495 = vpack.c.b16 %v432, %v431
      %v496 = vpack.c.b16 %v434, %v433
      %v497 = vpack.c.b16 %v436, %v435
      %v498 = vpack.c.b16 %v438, %v437
      %v499 = vpack.c.b16 %v440, %v439
      %v500 = vpack.c.b16 %v442, %v441
      %v501 = vpack.c.b16 %v444, %v443
      %v502 = vpack.c.b16 %v446, %v445
      %v503 = vpack.c.b16 %v448, %v447
      %v504 = vpack.c.b16 %v450, %v449
      %v505 = vpack.c.b16 %v452, %v451
      %v506 = vpack.c.b16 %v454, %v453
      %v507 = vpack.c.b16 %v456, %v455
      %v508 = vpack.c.b16 %v458, %v457
      %v509 = vpack.c.b16 %v460, %v459
      %v510 = vpack.c.b16 %v462, %v461
      %v511 = vpack.c.b16 %v464, %v463
      %v512 = vpack.c.b16 %v466, %v465
      %v513 = vpack.c.b16 %v468, %v467
      %v514 = vpack.c.b16 %v470, %v469
      %v515 = vpack.c.b16 %v472, %v471
      %v516 = vpack.c.b16 %v474, %v473
      %v517 = vpack.c.b16 %v476, %v475
      %v518 = vpack.c.b16 %v478, %v477
      %v519 = vpack.c.b16 %v480, %v479
      %v520 = vpack.c.b16 %v482, %v481
      %v521 = vpack.c.b16 %v484, %v483
      %v522 = vpack.c.b16 %v486, %v485
      %v523 = vpack.c.b16 %v488, %v487
      %v524 = vpack.c.b16 %v490, %v489
      %v525 = vpack.c.b16 %v492, %v491
      %v526 = vpack.c.b16 %v494, %v493
      %559 = vmatprep.subr.bf16.mxu0 0
      %560 = vmatpush1.bf16.msra.mxu0 %v502
      %561 = vmatprep.subr.bf16.mxu0 0
      %562 = vmatpush1.bf16.msra.mxu0 %v501
      %563 = vmatprep.subr.bf16.mxu0 0
      %564 = vmatpush1.bf16.msra.mxu0 %v500
      %565 = vmatprep.subr.bf16.mxu0 0
      %566 = vmatpush1.bf16.msra.mxu0 %v499
      %567 = vmatprep.subr.bf16.mxu0 0
      %568 = vmatpush1.bf16.msra.mxu0 %v498
      %569 = vmatprep.subr.bf16.mxu0 0
      %570 = vmatpush1.bf16.msra.mxu0 %v497
      %571 = vmatprep.subr.bf16.mxu0 0
      %572 = vmatpush1.bf16.msra.mxu0 %v496
      %573 = vmatprep.subr.bf16.mxu0 0
      %574 = vmatpush1.bf16.msra.mxu0 %v495
      %575 = vmatprep.subr.bf16.mxu0 0
      %576 = vmatpush2.bf16.msra.mxu0 %v510
      %577 = vmatprep.subr.bf16.mxu0 0
      %578 = vmatpush2.bf16.msra.mxu0 %v509
      %579 = vmatprep.subr.bf16.mxu0 0
      %580 = vmatpush2.bf16.msra.mxu0 %v508
      %581 = vmatprep.subr.bf16.mxu0 0
      %582 = vmatpush2.bf16.msra.mxu0 %v507
      %583 = vmatprep.subr.bf16.mxu0 0
      %584 = vmatpush2.bf16.msra.mxu0 %v506
      %585 = vmatprep.subr.bf16.mxu0 0
      %586 = vmatpush2.bf16.msra.mxu0 %v505
      %587 = vmatprep.subr.bf16.mxu0 0
      %588 = vmatpush2.bf16.msra.mxu0 %v504
      %589 = vmatprep.subr.bf16.mxu0 0
      %590 = vmatpush2.bf16.msra.mxu0 %v503
      %591 = vmatprep.mubr.bf16.mxu0 %v300
      %592 = vmatmul.mubr.bf16.gmra.mxu0 %v299
      %v593 = vpop.f32.mrf.mxu0
      %v594 = vadd.f32 0.0, %v593
      %v595 = vpop.f32.mrf.mxu0
      %v596 = vpop.f32.mrf.mxu0
      %v597 = vpop.f32.mrf.mxu0
      %598 = vdwg.mxu0
      %599 = vmatprep.subr.bf16.mxu0 0
      %600 = vmatpush1.bf16.msra.mxu0 %v518
      %601 = vmatprep.subr.bf16.mxu0 0
      %602 = vmatpush1.bf16.msra.mxu0 %v517
      %603 = vmatprep.subr.bf16.mxu0 0
      %604 = vmatpush1.bf16.msra.mxu0 %v516
      %605 = vmatprep.subr.bf16.mxu0 0
      %606 = vmatpush1.bf16.msra.mxu0 %v515
      %607 = vmatprep.subr.bf16.mxu0 0
      %608 = vmatpush1.bf16.msra.mxu0 %v514
      %609 = vmatprep.subr.bf16.mxu0 0
      %610 = vmatpush1.bf16.msra.mxu0 %v513
      %611 = vmatprep.subr.bf16.mxu0 0
      %612 = vmatpush1.bf16.msra.mxu0 %v512
      %613 = vmatprep.subr.bf16.mxu0 0
      %614 = vmatpush1.bf16.msra.mxu0 %v511
      %615 = vmatprep.subr.bf16.mxu0 0
      %616 = vmatpush2.bf16.msra.mxu0 %v526
      %617 = vmatprep.subr.bf16.mxu0 0
      %618 = vmatpush2.bf16.msra.mxu0 %v525
      %619 = vmatprep.subr.bf16.mxu0 0
      %620 = vmatpush2.bf16.msra.mxu0 %v524
      %621 = vmatprep.subr.bf16.mxu0 0
      %622 = vmatpush2.bf16.msra.mxu0 %v523
      %623 = vmatprep.subr.bf16.mxu0 0
      %624 = vmatpush2.bf16.msra.mxu0 %v522
      %625 = vmatprep.subr.bf16.mxu0 0
      %626 = vmatpush2.bf16.msra.mxu0 %v521
      %627 = vmatprep.subr.bf16.mxu0 0
      %628 = vmatpush2.bf16.msra.mxu0 %v520
      %629 = vmatprep.subr.bf16.mxu0 0
      %630 = vmatpush2.bf16.msra.mxu0 %v519
      %631 = vmatprep.mubr.bf16.mxu0 %v302
      %632 = vmatmul.mubr.bf16.gmra.mxu0 %v301
      %v633 = vpop.f32.mrf.mxu0
      %v634 = vadd.f32 %v594, %v633
      %v635 = vpop.f32.mrf.mxu0
      %v636 = vpop.f32.mrf.mxu0
      %v637 = vpop.f32.mrf.mxu0
      %638 = vdwg.mxu0
      %v639 = vadd.f32 %v294, %v634
      %640 = vst [vmem:[#allocation2] sm:$0xff] %v639
      %p641 = scmp.eq.s32.totalorder %s18, 3
      // Predicated region
      $region53: #{goat_mlp_forward.3} parent=47 // pred_check
        %p642 = pneg %p641
      $region54: #{goat_mlp_forward.3} parent=47 // pred_check_branch
        %644 = sbr.rel (%p642) target = $region56
      $region55: #{goat_mlp_forward.3} parent=47 // pred_region
        %v645 = vld [vmem:[#allocation2] sm:$0xff]
        %v646 = vld [vmem:[%s2] sm:$0x1]
        %v648 = vlaneseq
        %v649 = vshrl.u32 %v648, 7
        %v650 = vsub.s32 0, %v649
        %v651 = vrot.slane %v646, %v650
        %v653 = vadd.f32 %v645, %v651
        %v654 = vmax.f32 %v653, 0.0
        %v655 = vpack.c.bf16 %v654, %v654
        %v656 = vld [vmem:[%s3] sm:$0xf]
        %v657 = vld [vmem:[%s3 + $0x4] sm:$0xf]
        %v658 = vld [vmem:[%s3 + $0x8] sm:$0xf]
        %v659 = vld [vmem:[%s3 + $0xc] sm:$0xf]
        %v660 = vld [vmem:[%s3 + $0x10] sm:$0xf]
        %v661 = vld [vmem:[%s3 + $0x14] sm:$0xf]
        %v662 = vld [vmem:[%s3 + $0x18] sm:$0xf]
        %v663 = vld [vmem:[%s3 + $0x1c] sm:$0xf]
        %v664 = vld [vmem:[%s3 + $0x20] sm:$0xf]
        %v665 = vld [vmem:[%s3 + $0x24] sm:$0xf]
        %v666 = vld [vmem:[%s3 + $0x28] sm:$0xf]
        %v667 = vld [vmem:[%s3 + $0x2c] sm:$0xf]
        %v668 = vld [vmem:[%s3 + $0x30] sm:$0xf]
        %v669 = vld [vmem:[%s3 + $0x34] sm:$0xf]
        %v670 = vld [vmem:[%s3 + $0x38] sm:$0xf]
        %v671 = vld [vmem:[%s3 + $0x3c] sm:$0xf]
        %v672 = vld [vmem:[%s4] sm:$0x1]
        %v674 = vlaneseq
        %v675 = vshrl.u32 %v674, 7
        %v676 = vsub.s32 0, %v675
        %v677 = vrot.slane %v672, %v676
        %v695 = vunpack.c.l.b16 %v656
        %v696 = vunpack.c.l.b16 %v657
        %v697 = vunpack.c.l.b16 %v658
        %v698 = vunpack.c.l.b16 %v659
        %v699 = vunpack.c.l.b16 %v660
        %v700 = vunpack.c.l.b16 %v661
        %v701 = vunpack.c.l.b16 %v662
        %v702 = vunpack.c.l.b16 %v663
        %v703 = vunpack.c.l.b16 %v664
        %v704 = vunpack.c.l.b16 %v665
        %v705 = vunpack.c.l.b16 %v666
        %v706 = vunpack.c.l.b16 %v667
        %v707 = vunpack.c.l.b16 %v668
        %v708 = vunpack.c.l.b16 %v669
        %v709 = vunpack.c.l.b16 %v670
        %v710 = vunpack.c.l.b16 %v671
        %v711 = vpack.c.b16 %v696, %v695
        %v712 = vpack.c.b16 %v698, %v697
        %v713 = vpack.c.b16 %v700, %v699
        %v714 = vpack.c.b16 %v702, %v701
        %v715 = vpack.c.b16 %v704, %v703
        %v716 = vpack.c.b16 %v706, %v705
        %v717 = vpack.c.b16 %v708, %v707
        %v718 = vpack.c.b16 %v710, %v709
        %727 = vmatprep.subr.bf16.mxu0 0
        %728 = vmatpush1.bf16.msra.mxu0 %v718
        %729 = vmatprep.subr.bf16.mxu0 0
        %730 = vmatpush1.bf16.msra.mxu0 %v717
        %731 = vmatprep.subr.bf16.mxu0 0
        %732 = vmatpush1.bf16.msra.mxu0 %v716
        %733 = vmatprep.subr.bf16.mxu0 0
        %734 = vmatpush1.bf16.msra.mxu0 %v715
        %735 = vmatprep.subr.bf16.mxu0 0
        %736 = vmatpush1.bf16.msra.mxu0 %v714
        %737 = vmatprep.subr.bf16.mxu0 0
        %738 = vmatpush1.bf16.msra.mxu0 %v713
        %739 = vmatprep.subr.bf16.mxu0 0
        %740 = vmatpush1.bf16.msra.mxu0 %v712
        %741 = vmatprep.subr.bf16.mxu0 0
        %742 = vmatpush1.bf16.msra.mxu0 %v711
        %743 = vmatprep.subr.bf16.mxu0 0
        %744 = vmatpush2.bf16.msra.mxu0 0
        %745 = vmatprep.subr.bf16.mxu0 0
        %746 = vmatpush2.bf16.msra.mxu0 0
        %747 = vmatprep.subr.bf16.mxu0 0
        %748 = vmatpush2.bf16.msra.mxu0 0
        %749 = vmatprep.subr.bf16.mxu0 0
        %750 = vmatpush2.bf16.msra.mxu0 0
        %751 = vmatprep.subr.bf16.mxu0 0
        %752 = vmatpush2.bf16.msra.mxu0 0
        %753 = vmatprep.subr.bf16.mxu0 0
        %754 = vmatpush2.bf16.msra.mxu0 0
        %755 = vmatprep.subr.bf16.mxu0 0
        %756 = vmatpush2.bf16.msra.mxu0 0
        %757 = vmatprep.subr.bf16.mxu0 0
        %758 = vmatpush2.bf16.msra.mxu0 0
        %759 = vmatprep.mubr.bf16.mxu0 0
        %760 = vmatmul.mubr.bf16.gmra.mxu0 %v655
        %v761 = vpop.f32.mrf.mxu0
        %v762 = vadd.f32 %v677, %v761
        %v763 = vpop.f32.mrf.mxu0
        %v764 = vpop.f32.mrf.mxu0
        %v765 = vpop.f32.mrf.mxu0
        %766 = vdwg.mxu0
        %v767 = vmax.f32 %v762, 0.0
        %v768 = vpack.c.bf16 %v767, %v767
        %v769 = vld [vmem:[%s5] sm:$0xf]
        %v770 = vld [vmem:[%s5 + $0x4] sm:$0xf]
        %v771 = vld [vmem:[%s5 + $0x8] sm:$0xf]
        %v772 = vld [vmem:[%s5 + $0xc] sm:$0xf]
        %v773 = vld [vmem:[%s5 + $0x10] sm:$0xf]
        %v774 = vld [vmem:[%s5 + $0x14] sm:$0xf]
        %v775 = vld [vmem:[%s5 + $0x18] sm:$0xf]
        %v776 = vld [vmem:[%s5 + $0x1c] sm:$0xf]
        %v777 = vld [vmem:[%s5 + $0x20] sm:$0xf]
        %v778 = vld [vmem:[%s5 + $0x24] sm:$0xf]
        %v779 = vld [vmem:[%s5 + $0x28] sm:$0xf]
        %v780 = vld [vmem:[%s5 + $0x2c] sm:$0xf]
        %v781 = vld [vmem:[%s5 + $0x30] sm:$0xf]
        %v782 = vld [vmem:[%s5 + $0x34] sm:$0xf]
        %v783 = vld [vmem:[%s5 + $0x38] sm:$0xf]
        %v784 = vld [vmem:[%s5 + $0x3c] sm:$0xf]
        %v785 = vld [vmem:[%s6] sm:$0x1]
        %v787 = vlaneseq
        %v788 = vshrl.u32 %v787, 7
        %v789 = vsub.s32 0, %v788
        %v790 = vrot.slane %v785, %v789
        %v808 = vunpack.c.l.b16 %v769
        %v809 = vunpack.c.l.b16 %v770
        %v810 = vunpack.c.l.b16 %v771
        %v811 = vunpack.c.l.b16 %v772
        %v812 = vunpack.c.l.b16 %v773
        %v813 = vunpack.c.l.b16 %v774
        %v814 = vunpack.c.l.b16 %v775
        %v815 = vunpack.c.l.b16 %v776
        %v816 = vunpack.c.l.b16 %v777
        %v817 = vunpack.c.l.b16 %v778
        %v818 = vunpack.c.l.b16 %v779
        %v819 = vunpack.c.l.b16 %v780
        %v820 = vunpack.c.l.b16 %v781
        %v821 = vunpack.c.l.b16 %v782
        %v822 = vunpack.c.l.b16 %v783
        %v823 = vunpack.c.l.b16 %v784
        %v824 = vpack.c.b16 %v809, %v808
        %v825 = vpack.c.b16 %v811, %v810
        %v826 = vpack.c.b16 %v813, %v812
        %v827 = vpack.c.b16 %v815, %v814
        %v828 = vpack.c.b16 %v817, %v816
        %v829 = vpack.c.b16 %v819, %v818
        %v830 = vpack.c.b16 %v821, %v820
        %v831 = vpack.c.b16 %v823, %v822
        %840 = vmatprep.subr.bf16.mxu0 0
        %841 = vmatpush1.bf16.msra.mxu0 %v831
        %842 = vmatprep.subr.bf16.mxu0 0
        %843 = vmatpush1.bf16.msra.mxu0 %v830
        %844 = vmatprep.subr.bf16.mxu0 0
        %845 = vmatpush1.bf16.msra.mxu0 %v829
        %846 = vmatprep.subr.bf16.mxu0 0
        %847 = vmatpush1.bf16.msra.mxu0 %v828
        %848 = vmatprep.subr.bf16.mxu0 0
        %849 = vmatpush1.bf16.msra.mxu0 %v827
        %850 = vmatprep.subr.bf16.mxu0 0
        %851 = vmatpush1.bf16.msra.mxu0 %v826
        %852 = vmatprep.subr.bf16.mxu0 0
        %853 = vmatpush1.bf16.msra.mxu0 %v825
        %854 = vmatprep.subr.bf16.mxu0 0
        %855 = vmatpush1.bf16.msra.mxu0 %v824
        %856 = vmatprep.subr.bf16.mxu0 0
        %857 = vmatpush2.bf16.msra.mxu0 0
        %858 = vmatprep.subr.bf16.mxu0 0
        %859 = vmatpush2.bf16.msra.mxu0 0
        %860 = vmatprep.subr.bf16.mxu0 0
        %861 = vmatpush2.bf16.msra.mxu0 0
        %862 = vmatprep.subr.bf16.mxu0 0
        %863 = vmatpush2.bf16.msra.mxu0 0
        %864 = vmatprep.subr.bf16.mxu0 0
        %865 = vmatpush2.bf16.msra.mxu0 0
        %866 = vmatprep.subr.bf16.mxu0 0
        %867 = vmatpush2.bf16.msra.mxu0 0
        %868 = vmatprep.subr.bf16.mxu0 0
        %869 = vmatpush2.bf16.msra.mxu0 0
        %870 = vmatprep.subr.bf16.mxu0 0
        %871 = vmatpush2.bf16.msra.mxu0 0
        %872 = vmatprep.mubr.bf16.mxu0 0
        %873 = vmatmul.mubr.bf16.gmra.mxu0 %v768
        %v874 = vpop.f32.mrf.mxu0
        %v875 = vadd.f32 %v790, %v874
        %v876 = vpop.f32.mrf.mxu0
        %v877 = vpop.f32.mrf.mxu0
        %v878 = vpop.f32.mrf.mxu0
        %879 = vdwg.mxu0
        %vm880 = vcmask 80896
        %881 = vst.msk [vmem:[%s7] sm:$0xff] %vm880, %v875
      $region56: #{goat_mlp_forward.3} parent=47 // pred_fallthru
        _
      // Predicated region
      $region57: #{goat_mlp_forward.3} parent=47 // pred_check
        %p882 = pneg %p188
      $region58: #{goat_mlp_forward.3} parent=47 // pred_check_branch
        %884 = sbr.rel (%p882) target = $region60
      $region59: #{goat_mlp_forward.3} parent=47 // pred_region
        _
      $region60: #{goat_mlp_forward.3} parent=47 // pred_fallthru
        _
      // Predicated region
      $region61: #{goat_mlp_forward.3} parent=47 // pred_check
        %p885 = pneg %p188
      $region62: #{goat_mlp_forward.3} parent=47 // pred_check_branch
        %887 = sbr.rel (%p885) target = $region64
      $region63: #{goat_mlp_forward.3} parent=47 // pred_region
        _
      $region64: #{goat_mlp_forward.3} parent=47 // pred_fallthru
        _
    $region48: #{goat_mlp_forward.3} parent=5 // pred_fallthru
      _
    %p888 = scmp.le.s32.totalorder 2, %s13
    // Predicated region
    $region65: #{goat_mlp_forward.3} parent=5 // pred_check
      %p889 = pneg %p888
    $region66: #{goat_mlp_forward.3} parent=5 // pred_check_branch
      %891 = sbr.rel (%p889) target = $region68
    $region67: #{goat_mlp_forward.3} parent=5 // pred_region
      %s892 = ssub.s32 %s13, 2
    $region68: #{goat_mlp_forward.3} parent=5 // pred_fallthru
      _
  $region6: #{goat_mlp_forward.3} parent=0 // loop_footer
    %s17 = sadd.s32 1, %s13
  $region7: #{goat_mlp_forward.3} parent=0 // loop_footer_branch
    %12 = sbr.rel target = $region3
  $region8: #{goat_mlp_forward.3} parent=0 // loop_exit
    _

// kernel: goat_mlp_forward.2
$region0: #{goat_mlp_forward.2}
  #allocation0 [shape = 'u32[]', space=smem, size = 0x4, offset = 0x4, fixed_abs, tag = 'smem constant byte address 0x4 - core index']
  #allocation1 [shape = 'u32[144,128]{1,0:T(1,128)}', space=vmem, size = 0x12000, scoped, tag = 'internal scratch']
  %s0 = inlined_call_operand.vmem [shape: f32[2,8,256], index: 0, kind: input, shape index: {}]
  %s1 = inlined_call_operand.hbm [shape: bf16[960,256], index: 1, kind: input, shape index: {}]
  %s2 = inlined_call_operand.vmem [shape: f32[1,256], index: 2, kind: input, shape index: {}]
  %s3 = inlined_call_operand.hbm [shape: bf16[960,256], index: 3, kind: input, shape index: {}]
  %s4 = inlined_call_operand.vmem [shape: f32[1,256], index: 4, kind: input, shape index: {}]
  %s5 = inlined_call_operand.vmem [shape: f32[1,256], index: 5, kind: input, shape index: {}]
  %s6 = inlined_call_operand.vmem [shape: f32[1,256], index: 6, kind: input, shape index: {}]
  %s7 = inlined_call_operand.vmem [shape: f32[2,8,256], index: 7, kind: output, shape index: {}]
  %s8 = sld [smem:[#allocation0]]
  $region69: #{goat_mlp_forward.2} parent=0
    _
  %s10 = ssub.s32 1, %s8
  %s11 = scalar_select 0, %s10, %s8
  $region1: #{goat_mlp_forward.2} parent=0
    #allocation2 [shape = 'u8[491520]{0}', space=vmem, size = 0x78000, scoped, tag = 'input window, operand 1, single buffered']
    #allocation3 [shape = 's32[2]{0}', space=sflag, size = 0x8, scoped, tag = 'scoped memory for goat_mlp_forward.2']
    #allocation4 [shape = 'u8[491520]{0}', space=vmem, size = 0x78000, scoped, tag = 'input window, operand 3, single buffered']
    #allocation5 [shape = 's32[1]{0}', space=sflag, size = 0x4, scoped, tag = 'scoped memory for goat_mlp_forward.2']
    %12 = vsyncpa [#allocation3], 0
    %13 = vsyncpa [#allocation5], 0
    loop: start=0, step=1, limit=4
    $region2: #{goat_mlp_forward.2} parent=1 // loop_pre_header
      _
    $region3: #{goat_mlp_forward.2} parent=1 // loop_header
      %s15 = sphi 0, %s19
      %p16 = scmp.ge.s32.totalorder %s15, 4
      %s25 = sphi 0, %s27
      %s28 = sphi 0, %s25
      %s29 = sphi 0, %s28
      %s45 = sphi 0, %s29
      %s49 = sphi 0, %s49
      %s51 = sphi 0, %s49
      %s52 = sphi 0, %s51
      %s66 = sphi 0, %s52
      %s70 = sphi 0, %s70
      %s72 = sphi 0, %s70
      %s73 = sphi 0, %s72
      %s87 = sphi 0, %s73
      %s91 = sphi 0, %s91
      %s93 = sphi 0, %s91
      %s94 = sphi 0, %s93
      %s108 = sphi 0, %s94
      %s112 = sphi 0, %s112
      %s114 = sphi 0, %s112
      %s115 = sphi 0, %s114
      %s129 = sphi 0, %s115
      %s133 = sphi 0, %s133
      %s135 = sphi 0, %s133
      %s136 = sphi 0, %s135
      %s150 = sphi 0, %s136
      %s154 = sphi 0, %s154
      %s156 = sphi 0, %s154
      %s157 = sphi 0, %s156
      %s171 = sphi 0, %s157
      %s177 = sphi 0, %s179
      %s180 = sphi 0, %s177
      %s181 = sphi 0, %s180
      %s197 = sphi 0, %s181
    $region4: #{goat_mlp_forward.2} parent=1 // loop_header_branch
      %18 = sbr.rel (%p16) target = $region8
    $region5: #{goat_mlp_forward.2} parent=1 // loop_body
      %s20 = ssub.s32 %s15, 1
      %s21 = ssub.s32 %s15, 2
      %s22 = sadd.s32 %s15, 1
      %s23 = ssub.s32 %s15, %s22
      %p24 = scmp.eq.s32.totalorder %s23, 0
      %s26 = sadd.s32 %s25, 1
      %s27 = scalar_select %p24, %s25, %s26
      %p30 = pneg %p24
      %p31 = scmp.eq.s32.totalorder %s15, 1
      %p32 = por %p30, %p31
      %p33 = scmp.ne.s32.totalorder %s25, %s28
      %p34 = scmp.eq.s32.totalorder %s15, 0
      %p35 = por %p33, %p34
      %p36 = scmp.ne.s32.totalorder %s25, %s28
      %p37 = scmp.eq.s32.totalorder %s20, 1
      %p38 = por %p36, %p37
      %p39 = scmp.ne.s32.totalorder %s28, %s29
      %p40 = scmp.eq.s32.totalorder %s20, 0
      %p41 = por %p39, %p40
      %p42 = scmp.ne.s32.totalorder %s28, %s29
      %p43 = scmp.eq.s32.totalorder %s21, 1
      %p44 = por %p42, %p43
      %p46 = scmp.ne.s32.totalorder %s29, %s45
      %p47 = scmp.eq.s32.totalorder %s21, 0
      %p48 = por %p46, %p47
      %s50 = sadd.s32 %s49, 1
      %p53 = scmp.eq.s32.totalorder %s15, 1
      %p54 = scmp.ne.s32.totalorder %s49, %s51
      %p55 = scmp.eq.s32.totalorder %s15, 0
      %p56 = por %p54, %p55
      %p57 = scmp.ne.s32.totalorder %s49, %s51
      %p58 = scmp.eq.s32.totalorder %s20, 1
      %p59 = por %p57, %p58
      %p60 = scmp.ne.s32.totalorder %s51, %s52
      %p61 = scmp.eq.s32.totalorder %s20, 0
      %p62 = por %p60, %p61
      %p63 = scmp.ne.s32.totalorder %s51, %s52
      %p64 = scmp.eq.s32.totalorder %s21, 1
      %p65 = por %p63, %p64
      %p67 = scmp.ne.s32.totalorder %s52, %s66
      %p68 = scmp.eq.s32.totalorder %s21, 0
      %p69 = por %p67, %p68
      %s71 = sadd.s32 %s70, 1
      %p74 = scmp.eq.s32.totalorder %s15, 1
      %p75 = scmp.ne.s32.totalorder %s70, %s72
      %p76 = scmp.eq.s32.totalorder %s15, 0
      %p77 = por %p75, %p76
      %p78 = scmp.ne.s32.totalorder %s70, %s72
      %p79 = scmp.eq.s32.totalorder %s20, 1
      %p80 = por %p78, %p79
      %p81 = scmp.ne.s32.totalorder %s72, %s73
      %p82 = scmp.eq.s32.totalorder %s20, 0
      %p83 = por %p81, %p82
      %p84 = scmp.ne.s32.totalorder %s72, %s73
      %p85 = scmp.eq.s32.totalorder %s21, 1
      %p86 = por %p84, %p85
      %p88 = scmp.ne.s32.totalorder %s73, %s87
      %p89 = scmp.eq.s32.totalorder %s21, 0
      %p90 = por %p88, %p89
      %s92 = sadd.s32 %s91, 1
      %p95 = scmp.eq.s32.totalorder %s15, 1
      %p96 = scmp.ne.s32.totalorder %s91, %s93
      %p97 = scmp.eq.s32.totalorder %s15, 0
      %p98 = por %p96, %p97
      %p99 = scmp.ne.s32.totalorder %s91, %s93
      %p100 = scmp.eq.s32.totalorder %s20, 1
      %p101 = por %p99, %p100
      %p102 = scmp.ne.s32.totalorder %s93, %s94
      %p103 = scmp.eq.s32.totalorder %s20, 0
      %p104 = por %p102, %p103
      %p105 = scmp.ne.s32.totalorder %s93, %s94
      %p106 = scmp.eq.s32.totalorder %s21, 1
      %p107 = por %p105, %p106
      %p109 = scmp.ne.s32.totalorder %s94, %s108
      %p110 = scmp.eq.s32.totalorder %s21, 0
      %p111 = por %p109, %p110
      %s113 = sadd.s32 %s112, 1
      %p116 = scmp.eq.s32.totalorder %s15, 1
      %p117 = scmp.ne.s32.totalorder %s112, %s114
      %p118 = scmp.eq.s32.totalorder %s15, 0
      %p119 = por %p117, %p118
      %p120 = scmp.ne.s32.totalorder %s112, %s114
      %p121 = scmp.eq.s32.totalorder %s20, 1
      %p122 = por %p120, %p121
      %p123 = scmp.ne.s32.totalorder %s114, %s115
      %p124 = scmp.eq.s32.totalorder %s20, 0
      %p125 = por %p123, %p124
      %p126 = scmp.ne.s32.totalorder %s114, %s115
      %p127 = scmp.eq.s32.totalorder %s21, 1
      %p128 = por %p126, %p127
      %p130 = scmp.ne.s32.totalorder %s115, %s129
      %p131 = scmp.eq.s32.totalorder %s21, 0
      %p132 = por %p130, %p131
      %s134 = sadd.s32 %s133, 1
      %p137 = scmp.eq.s32.totalorder %s15, 1
      %p138 = scmp.ne.s32.totalorder %s133, %s135
      %p139 = scmp.eq.s32.totalorder %s15, 0
      %p140 = por %p138, %p139
      %p141 = scmp.ne.s32.totalorder %s133, %s135
      %p142 = scmp.eq.s32.totalorder %s20, 1
      %p143 = por %p141, %p142
      %p144 = scmp.ne.s32.totalorder %s135, %s136
      %p145 = scmp.eq.s32.totalorder %s20, 0
      %p146 = por %p144, %p145
      %p147 = scmp.ne.s32.totalorder %s135, %s136
      %p148 = scmp.eq.s32.totalorder %s21, 1
      %p149 = por %p147, %p148
      %p151 = scmp.ne.s32.totalorder %s136, %s150
      %p152 = scmp.eq.s32.totalorder %s21, 0
      %p153 = por %p151, %p152
      %s155 = sadd.s32 %s154, 1
      %p158 = scmp.eq.s32.totalorder %s15, 1
      %p159 = scmp.ne.s32.totalorder %s154, %s156
      %p160 = scmp.eq.s32.totalorder %s15, 0
      %p161 = por %p159, %p160
      %p162 = scmp.ne.s32.totalorder %s154, %s156
      %p163 = scmp.eq.s32.totalorder %s20, 1
      %p164 = por %p162, %p163
      %p165 = scmp.ne.s32.totalorder %s156, %s157
      %p166 = scmp.eq.s32.totalorder %s20, 0
      %p167 = por %p165, %p166
      %p168 = scmp.ne.s32.totalorder %s156, %s157
      %p169 = scmp.eq.s32.totalorder %s21, 1
      %p170 = por %p168, %p169
      %p172 = scmp.ne.s32.totalorder %s157, %s171
      %p173 = scmp.eq.s32.totalorder %s21, 0
      %p174 = por %p172, %p173
      %s175 = ssub.s32 %s15, %s22
      %p176 = scmp.eq.s32.totalorder %s175, 0
      %s178 = sadd.s32 %s177, 1
      %s179 = scalar_select %p176, %s177, %s178
      %p182 = pneg %p176
      %p183 = scmp.eq.s32.totalorder %s15, 1
      %p184 = por %p182, %p183
      %p185 = scmp.ne.s32.totalorder %s177, %s180
      %p186 = scmp.eq.s32.totalorder %s15, 0
      %p187 = por %p185, %p186
      %p188 = scmp.ne.s32.totalorder %s177, %s180
      %p189 = scmp.eq.s32.totalorder %s20, 1
      %p190 = por %p188, %p189
      %p191 = scmp.ne.s32.totalorder %s180, %s181
      %p192 = scmp.eq.s32.totalorder %s20, 0
      %p193 = por %p191, %p192
      %p194 = scmp.ne.s32.totalorder %s180, %s181
      %p195 = scmp.eq.s32.totalorder %s21, 1
      %p196 = por %p194, %p195
      %p198 = scmp.ne.s32.totalorder %s181, %s197
      %p199 = scmp.eq.s32.totalorder %s21, 0
      %p200 = por %p198, %p199
      %p201 = scmp.le.s32.totalorder 1, %s15
      %p202 = scmp.lt.s32.totalorder %s15, 3
      %p203 = pnand %p201, %p202
      %p204 = pneg %p203
      // Predicated region
      $region9: #{goat_mlp_forward.2} parent=5 // pred_check
        _
      $region10: #{goat_mlp_forward.2} parent=5 // pred_check_branch
        %206 = sbr.rel (%p203) target = $region12
      $region11: #{goat_mlp_forward.2} parent=5 // pred_region
        %s207 = ssub.s32 %s15, 1
        // Predicated region
        $region13: #{goat_mlp_forward.2} parent=11 // pred_check
          %p208 = pneg %p62
        $region14: #{goat_mlp_forward.2} parent=11 // pred_check_branch
          %210 = sbr.rel (%p208) target = $region16
        $region15: #{goat_mlp_forward.2} parent=11 // pred_region
          %s212 = ssub.s32 15360, 15360
          %213 = vsyncadd [#allocation3], %s212
          %s214 = sshll.u32 [#allocation2], 4
          %s215 = int_to_ptr.vmem [resolvable:$true] %s214
          %220 = dma.hbm_to_vmem [thread:$0]  %s1, 15360, %s215, [#allocation3], 128, 128, 8
        $region16: #{goat_mlp_forward.2} parent=11 // pred_fallthru
          _
        // Predicated region
        $region17: #{goat_mlp_forward.2} parent=11 // pred_check
          %p221 = pneg %p83
        $region18: #{goat_mlp_forward.2} parent=11 // pred_check_branch
          %223 = sbr.rel (%p221) target = $region20
        $region19: #{goat_mlp_forward.2} parent=11 // pred_region
          _
        $region20: #{goat_mlp_forward.2} parent=11 // pred_fallthru
          _
        // Predicated region
        $region21: #{goat_mlp_forward.2} parent=11 // pred_check
          %p224 = pneg %p104
        $region22: #{goat_mlp_forward.2} parent=11 // pred_check_branch
          %226 = sbr.rel (%p224) target = $region24
        $region23: #{goat_mlp_forward.2} parent=11 // pred_region
          %s228 = ssub.s32 15360, 15360
          %229 = vsyncadd [#allocation5], %s228
          %s230 = sshll.u32 [#allocation4], 4
          %s231 = int_to_ptr.vmem [resolvable:$true] %s230
          %236 = dma.hbm_to_vmem [thread:$0]  %s3, 15360, %s231, [#allocation5], 128, 128, 8
        $region24: #{goat_mlp_forward.2} parent=11 // pred_fallthru
          _
        // Predicated region
        $region25: #{goat_mlp_forward.2} parent=11 // pred_check
          %p237 = pneg %p125
        $region26: #{goat_mlp_forward.2} parent=11 // pred_check_branch
          %239 = sbr.rel (%p237) target = $region28
        $region27: #{goat_mlp_forward.2} parent=11 // pred_region
          _
        $region28: #{goat_mlp_forward.2} parent=11 // pred_fallthru
          _
        // Predicated region
        $region29: #{goat_mlp_forward.2} parent=11 // pred_check
          %p240 = pneg %p146
        $region30: #{goat_mlp_forward.2} parent=11 // pred_check_branch
          %242 = sbr.rel (%p240) target = $region32
        $region31: #{goat_mlp_forward.2} parent=11 // pred_region
          _
        $region32: #{goat_mlp_forward.2} parent=11 // pred_fallthru
          _
        // Predicated region
        $region33: #{goat_mlp_forward.2} parent=11 // pred_check
          %p243 = pneg %p167
        $region34: #{goat_mlp_forward.2} parent=11 // pred_check_branch
          %245 = sbr.rel (%p243) target = $region36
        $region35: #{goat_mlp_forward.2} parent=11 // pred_region
          _
        $region36: #{goat_mlp_forward.2} parent=11 // pred_fallthru
          _
      $region12: #{goat_mlp_forward.2} parent=5 // pred_fallthru
        _
      %p246 = scmp.lt.s32.totalorder %s15, 2
      // Predicated region
      $region37: #{goat_mlp_forward.2} parent=5 // pred_check
        %p247 = pneg %p246
      $region38: #{goat_mlp_forward.2} parent=5 // pred_check_branch
        %249 = sbr.rel (%p247) target = $region40
      $region39: #{goat_mlp_forward.2} parent=5 // pred_region
        // Predicated region
        $region41: #{goat_mlp_forward.2} parent=39 // pred_check
          %p250 = pneg %p35
        $region42: #{goat_mlp_forward.2} parent=39 // pred_check_branch
          %252 = sbr.rel (%p250) target = $region44
        $region43: #{goat_mlp_forward.2} parent=39 // pred_region
          %p253 = scmp.lt.s32.totalorder %s15, 1
          %s254 = scalar_select %p253, %s15, 1
          %s255 = smul.addr %s254, 2
          %s256 = smul.addr %s255, 8
          %s257 = scalar_lea.vmem %s0, %s256
        $region44: #{goat_mlp_forward.2} parent=39 // pred_fallthru
          _
      $region40: #{goat_mlp_forward.2} parent=5 // pred_fallthru
        _
      %p258 = scmp.le.s32.totalorder 1, %s15
      %p259 = scmp.lt.s32.totalorder %s15, 3
      %p260 = pnand %p258, %p259
      %p261 = pneg %p260
      // Predicated region
      $region45: #{goat_mlp_forward.2} parent=5 // pred_check
        _
      $region46: #{goat_mlp_forward.2} parent=5 // pred_check_branch
        %263 = sbr.rel (%p260) target = $region48
      $region47: #{goat_mlp_forward.2} parent=5 // pred_region
        %s264 = ssub.s32 %s15, 1
        // Predicated region
        $region49: #{goat_mlp_forward.2} parent=47 // pred_check
          %p265 = pneg %p62
        $region50: #{goat_mlp_forward.2} parent=47 // pred_check_branch
          %267 = sbr.rel (%p265) target = $region52
        $region51: #{goat_mlp_forward.2} parent=47 // pred_region
          %268 = dma.done [#allocation3], 15360
        $region52: #{goat_mlp_forward.2} parent=47 // pred_fallthru
          _
        // Predicated region
        $region53: #{goat_mlp_forward.2} parent=47 // pred_check
          %p269 = pneg %p104
        $region54: #{goat_mlp_forward.2} parent=47 // pred_check_branch
          %271 = sbr.rel (%p269) target = $region56
        $region55: #{goat_mlp_forward.2} parent=47 // pred_region
          %272 = dma.done [#allocation5], 15360
        $region56: #{goat_mlp_forward.2} parent=47 // pred_fallthru
          _
        %p273 = scmp.lt.s32.totalorder %s20, 1
        %s274 = scalar_select %p273, %s20, 1
        %s275 = smul.addr %s274, 2
        %s276 = smul.addr %s275, 8
        %s277 = scalar_lea.vmem %s0, %s276
        %p278 = pneg %p41
        %p279 = pneg %p38
        %p280 = pneg %p62
        %p281 = pneg %p59
        %p282 = pneg %p83
        %p283 = pneg %p80
        %p284 = pneg %p104
        %p285 = pneg %p101
        %p286 = pneg %p125
        %p287 = pneg %p122
        %p288 = pneg %p146
        %p289 = pneg %p143
        %p290 = pneg %p167
        %p291 = pneg %p164
        %p292 = pneg %p193
        %p293 = pneg %p190
        %p294 = scmp.lt.s32.totalorder %s20, 1
        %s295 = scalar_select %p294, %s20, 1
        %s296 = smul.addr %s295, 2
        %s297 = smul.addr %s296, 8
        %s298 = scalar_lea.vmem %s7, %s297
        %p299 = scmp.lt.s32.totalorder %s20, 1
        %s300 = scalar_select %p299, %s20, 1
        %s301 = smul.addr %s300, 2
        %s302 = smul.addr %s301, 8
        %s303 = scalar_lea.vmem %s0, %s302
        %p304 = scmp.lt.s32.totalorder %s20, 1
        %s305 = scalar_select %p304, %s20, 1
        %s306 = smul.addr %s305, 2
        %s307 = smul.addr %s306, 8
        %s308 = scalar_lea.vmem %s7, %s307
        %v310 = vld [vmem:[%s303] sm:$0xff]
        %v311 = vld [vmem:[%s303 + $0x8] sm:$0xff]
        %v312 = vld [vmem:[#allocation2] sm:$0xff]
        %v313 = vld [vmem:[#allocation2 + $0x8] sm:$0xff]
        %v314 = vld [vmem:[#allocation2 + $0x10] sm:$0xff]
        %v315 = vld [vmem:[#allocation2 + $0x18] sm:$0xff]
        %v316 = vld [vmem:[#allocation2 + $0x20] sm:$0xff]
        %v317 = vld [vmem:[#allocation2 + $0x28] sm:$0xff]
        %v318 = vld [vmem:[#allocation2 + $0x30] sm:$0xff]
        %v319 = vld [vmem:[#allocation2 + $0x38] sm:$0xff]
        %v320 = vld [vmem:[#allocation2 + $0x40] sm:$0xff]
        %v321 = vld [vmem:[#allocation2 + $0x48] sm:$0xff]
        %v322 = vld [vmem:[#allocation2 + $0x50] sm:$0xff]
        %v323 = vld [vmem:[#allocation2 + $0x58] sm:$0xff]
        %v324 = vld [vmem:[#allocation2 + $0x60] sm:$0xff]
        %v325 = vld [vmem:[#allocation2 + $0x68] sm:$0xff]
        %v326 = vld [vmem:[#allocation2 + $0x70] sm:$0xff]
        %v327 = vld [vmem:[#allocation2 + $0x78] sm:$0xff]
        %v328 = vld [vmem:[#allocation2 + $0x80] sm:$0xff]
        %v329 = vld [vmem:[#allocation2 + $0x88] sm:$0xff]
        %v330 = vld [vmem:[#allocation2 + $0x90] sm:$0xff]
        %v331 = vld [vmem:[#allocation2 + $0x98] sm:$0xff]
        %v332 = vld [vmem:[#allocation2 + $0xa0] sm:$0xff]
        %v333 = vld [vmem:[#allocation2 + $0xa8] sm:$0xff]
        %v334 = vld [vmem:[#allocation2 + $0xb0] sm:$0xff]
        %v335 = vld [vmem:[#allocation2 + $0xb8] sm:$0xff]
        %v336 = vld [vmem:[#allocation2 + $0xc0] sm:$0xff]
        %v337 = vld [vmem:[#allocation2 + $0xc8] sm:$0xff]
        %v338 = vld [vmem:[#allocation2 + $0xd0] sm:$0xff]
        %v339 = vld [vmem:[#allocation2 + $0xd8] sm:$0xff]
        %v340 = vld [vmem:[#allocation2 + $0xe0] sm:$0xff]
        %v341 = vld [vmem:[#allocation2 + $0xe8] sm:$0xff]
        %v342 = vld [vmem:[#allocation2 + $0xf0] sm:$0xff]
        %v343 = vld [vmem:[#allocation2 + $0xf8] sm:$0xff]
        %v344 = vld [vmem:[#allocation2 + $0x100] sm:$0xff]
        %v345 = vld [vmem:[#allocation2 + $0x108] sm:$0xff]
        %v346 = vld [vmem:[#allocation2 + $0x110] sm:$0xff]
        %v347 = vld [vmem:[#allocation2 + $0x118] sm:$0xff]
        %v348 = vld [vmem:[#allocation2 + $0x120] sm:$0xff]
        %v349 = vld [vmem:[#allocation2 + $0x128] sm:$0xff]
        %v350 = vld [vmem:[#allocation2 + $0x130] sm:$0xff]
        %v351 = vld [vmem:[#allocation2 + $0x138] sm:$0xff]
        %v352 = vld [vmem:[#allocation2 + $0x140] sm:$0xff]
        %v353 = vld [vmem:[#allocation2 + $0x148] sm:$0xff]
        %v354 = vld [vmem:[#allocation2 + $0x150] sm:$0xff]
        %v355 = vld [vmem:[#allocation2 + $0x158] sm:$0xff]
        %v356 = vld [vmem:[#allocation2 + $0x160] sm:$0xff]
        %v357 = vld [vmem:[#allocation2 + $0x168] sm:$0xff]
        %v358 = vld [vmem:[#allocation2 + $0x170] sm:$0xff]
        %v359 = vld [vmem:[#allocation2 + $0x178] sm:$0xff]
        %v360 = vld [vmem:[#allocation2 + $0x180] sm:$0xff]
        %v361 = vld [vmem:[#allocation2 + $0x188] sm:$0xff]
        %v362 = vld [vmem:[#allocation2 + $0x190] sm:$0xff]
        %v363 = vld [vmem:[#allocation2 + $0x198] sm:$0xff]
        %v364 = vld [vmem:[#allocation2 + $0x1a0] sm:$0xff]
        %v365 = vld [vmem:[#allocation2 + $0x1a8] sm:$0xff]
        %v366 = vld [vmem:[#allocation2 + $0x1b0] sm:$0xff]
        %v367 = vld [vmem:[#allocation2 + $0x1b8] sm:$0xff]
        %v368 = vld [vmem:[#allocation2 + $0x1c0] sm:$0xff]
        %v369 = vld [vmem:[#allocation2 + $0x1c8] sm:$0xff]
        %v370 = vld [vmem:[#allocation2 + $0x1d0] sm:$0xff]
        %v371 = vld [vmem:[#allocation2 + $0x1d8] sm:$0xff]
        %v372 = vld [vmem:[#allocation2 + $0x1e0] sm:$0xff]
        %v373 = vld [vmem:[#allocation2 + $0x1e8] sm:$0xff]
        %v374 = vld [vmem:[#allocation2 + $0x1f0] sm:$0xff]
        %v375 = vld [vmem:[#allocation2 + $0x1f8] sm:$0xff]
        %v376 = vld [vmem:[#allocation2 + $0x200] sm:$0xff]
        %v377 = vld [vmem:[#allocation2 + $0x208] sm:$0xff]
        %v378 = vld [vmem:[#allocation2 + $0x210] sm:$0xff]
        %v379 = vld [vmem:[#allocation2 + $0x218] sm:$0xff]
        %v380 = vld [vmem:[#allocation2 + $0x220] sm:$0xff]
        %v381 = vld [vmem:[#allocation2 + $0x228] sm:$0xff]
        %v382 = vld [vmem:[#allocation2 + $0x230] sm:$0xff]
        %v383 = vld [vmem:[#allocation2 + $0x238] sm:$0xff]
        %v384 = vld [vmem:[#allocation2 + $0x240] sm:$0xff]
        %v385 = vld [vmem:[#allocation2 + $0x248] sm:$0xff]
        %v386 = vld [vmem:[#allocation2 + $0x250] sm:$0xff]
        %v387 = vld [vmem:[#allocation2 + $0x258] sm:$0xff]
        %v388 = vld [vmem:[#allocation2 + $0x260] sm:$0xff]
        %v389 = vld [vmem:[#allocation2 + $0x268] sm:$0xff]
        %v390 = vld [vmem:[#allocation2 + $0x270] sm:$0xff]
        %v391 = vld [vmem:[#allocation2 + $0x278] sm:$0xff]
        %v392 = vld [vmem:[#allocation2 + $0x280] sm:$0xff]
        %v393 = vld [vmem:[#allocation2 + $0x288] sm:$0xff]
        %v394 = vld [vmem:[#allocation2 + $0x290] sm:$0xff]
        %v395 = vld [vmem:[#allocation2 + $0x298] sm:$0xff]
        %v396 = vld [vmem:[#allocation2 + $0x2a0] sm:$0xff]
        %v397 = vld [vmem:[#allocation2 + $0x2a8] sm:$0xff]
        %v398 = vld [vmem:[#allocation2 + $0x2b0] sm:$0xff]
        %v399 = vld [vmem:[#allocation2 + $0x2b8] sm:$0xff]
        %v400 = vld [vmem:[#allocation2 + $0x2c0] sm:$0xff]
        %v401 = vld [vmem:[#allocation2 + $0x2c8] sm:$0xff]
        %v402 = vld [vmem:[#allocation2 + $0x2d0] sm:$0xff]
        %v403 = vld [vmem:[#allocation2 + $0x2d8] sm:$0xff]
        %v404 = vld [vmem:[#allocation2 + $0x2e0] sm:$0xff]
        %v405 = vld [vmem:[#allocation2 + $0x2e8] sm:$0xff]
        %v406 = vld [vmem:[#allocation2 + $0x2f0] sm:$0xff]
        %v407 = vld [vmem:[#allocation2 + $0x2f8] sm:$0xff]
        %v408 = vld [vmem:[#allocation2 + $0x300] sm:$0xff]
        %v409 = vld [vmem:[#allocation2 + $0x308] sm:$0xff]
        %v410 = vld [vmem:[#allocation2 + $0x310] sm:$0xff]
        %v411 = vld [vmem:[#allocation2 + $0x318] sm:$0xff]
        %v412 = vld [vmem:[#allocation2 + $0x320] sm:$0xff]
        %v413 = vld [vmem:[#allocation2 + $0x328] sm:$0xff]
        %v414 = vld [vmem:[#allocation2 + $0x330] sm:$0xff]
        %v415 = vld [vmem:[#allocation2 + $0x338] sm:$0xff]
        %v416 = vld [vmem:[#allocation2 + $0x340] sm:$0xff]
        %v417 = vld [vmem:[#allocation2 + $0x348] sm:$0xff]
        %v418 = vld [vmem:[#allocation2 + $0x350] sm:$0xff]
        %v419 = vld [vmem:[#allocation2 + $0x358] sm:$0xff]
        %v420 = vld [vmem:[#allocation2 + $0x360] sm:$0xff]
        %v421 = vld [vmem:[#allocation2 + $0x368] sm:$0xff]
        %v422 = vld [vmem:[#allocation2 + $0x370] sm:$0xff]
        %v423 = vld [vmem:[#allocation2 + $0x378] sm:$0xff]
        %v424 = vld [vmem:[#allocation2 + $0x380] sm:$0xff]
        %v425 = vld [vmem:[#allocation2 + $0x388] sm:$0xff]
        %v426 = vld [vmem:[#allocation2 + $0x390] sm:$0xff]
        %v427 = vld [vmem:[#allocation2 + $0x398] sm:$0xff]
        %v428 = vld [vmem:[#allocation2 + $0x3a0] sm:$0xff]
        %v429 = vld [vmem:[#allocation2 + $0x3a8] sm:$0xff]
        %v430 = vld [vmem:[#allocation2 + $0x3b0] sm:$0xff]
        %v431 = vld [vmem:[#allocation2 + $0x3b8] sm:$0xff]
        %434 = vrot.lane.b32.xlu0 %v310, 32
        %v435 = vpop.permute.xlu0 %434
        %436 = vrot.lane.b32.xlu0 %v311, 32
        %v437 = vpop.permute.xlu0 %436
        %vm438 = vcmask 261120
        %v439 = vsel %vm438, %v435, %v437
        %v442 = vsel %vm438, 0.0, %v435
        %v443 = vsel %vm438, %v437, 0.0
        %v446 = vrot.slane %v442, 7
        %v447 = vrot.slane %v439, 7
        %v448 = vrot.slane %v443, 7
        %vm452 = vcmask 1040384
        %v453 = vsel %vm452, 0.0, %v446
        %v454 = vsel %vm452, 0.0, %v447
        %v455 = vsel %vm452, 0.0, %v448
        %v456 = vsel %vm452, %v446, 0.0
        %v457 = vsel %vm452, %v447, 0.0
        %v458 = vsel %vm452, %v448, 0.0
        %vm465 = vcmask 1046528
        %v466 = vrot.slane %v453, 1
        %v467 = vrot.slane %v456, 1
        %v468 = vsel %vm465, %v466, %v467
        %v469 = vrot.slane %v454, 1
        %v470 = vrot.slane %v457, 1
        %v471 = vsel %vm465, %v469, %v470
        %v472 = vrot.slane %v455, 1
        %v473 = vrot.slane %v458, 1
        %v474 = vsel %vm465, %v472, %v473
        %475 = vrot.lane.b32.xlu0 %v468, 64
        %v476 = vpop.permute.xlu0 %475
        %477 = vrot.lane.b32.xlu0 %v471, 64
        %v478 = vpop.permute.xlu0 %477
        %479 = vrot.lane.b32.xlu0 %v474, 64
        %v480 = vpop.permute.xlu0 %479
        %vm481 = vcmask 523264
        %v482 = vsel %vm481, %v476, %v478
        %v483 = vsel %vm481, %v478, %v480
        %vm487 = vcmask 1045504
        %v488 = vrot.slane %v453, 2
        %v489 = vrot.slane %v456, 2
        %v490 = vsel %vm487, %v488, %v489
        %v491 = vrot.slane %v454, 2
        %v492 = vrot.slane %v457, 2
        %v493 = vsel %vm487, %v491, %v492
        %v494 = vrot.slane %v455, 2
        %v495 = vrot.slane %v458, 2
        %v496 = vsel %vm487, %v494, %v495
        %v500 = vsel %vm481, %v455, %v476
        %v501 = vpack.c.bf16 %v453, %v453
        %v502 = vpack.c.bf16 %v454, %v454
        %v503 = vpack.c.bf16 %v500, %v500
        %v504 = vpack.c.bf16 %v482, %v482
        %v505 = vpack.c.bf16 %v483, %v483
        %v506 = vpack.c.bf16 %v490, %v490
        %v507 = vpack.c.bf16 %v493, %v493
        %v508 = vpack.c.bf16 %v496, %v496
        %v509 = vld [vmem:[%s2] sm:$0x3]
        %v511 = vlaneseq
        %v512 = vshrl.u32 %v511, 7
        %v513 = vsub.s32 0, %v512
        %v514 = vrot.slane %v509, %v513
        %v515 = vlaneseq
        %v516 = vshrl.u32 %v515, 7
        %v517 = vsub.s32 1, %v516
        %v518 = vrot.slane %v509, %v517
        %v641 = vunpack.c.l.b16 %v312
        %v642 = vunpack.c.h.b16 %v312
        %v643 = vunpack.c.l.b16 %v313
        %v644 = vunpack.c.h.b16 %v313
        %v645 = vunpack.c.l.b16 %v314
        %v646 = vunpack.c.h.b16 %v314
        %v647 = vunpack.c.l.b16 %v315
        %v648 = vunpack.c.h.b16 %v315
        %v649 = vunpack.c.l.b16 %v316
        %v650 = vunpack.c.h.b16 %v316
        %v651 = vunpack.c.l.b16 %v317
        %v652 = vunpack.c.h.b16 %v317
        %v653 = vunpack.c.l.b16 %v318
        %v654 = vunpack.c.h.b16 %v318
        %v655 = vunpack.c.l.b16 %v319
        %v656 = vunpack.c.h.b16 %v319
        %v657 = vunpack.c.l.b16 %v320
        %v658 = vunpack.c.h.b16 %v320
        %v659 = vunpack.c.l.b16 %v321
        %v660 = vunpack.c.h.b16 %v321
        %v661 = vunpack.c.l.b16 %v322
        %v662 = vunpack.c.h.b16 %v322
        %v663 = vunpack.c.l.b16 %v323
        %v664 = vunpack.c.h.b16 %v323
        %v665 = vunpack.c.l.b16 %v324
        %v666 = vunpack.c.h.b16 %v324
        %v667 = vunpack.c.l.b16 %v325
        %v668 = vunpack.c.h.b16 %v325
        %v669 = vunpack.c.l.b16 %v326
        %v670 = vunpack.c.h.b16 %v326
        %v671 = vunpack.c.l.b16 %v327
        %v672 = vunpack.c.h.b16 %v327
        %v673 = vunpack.c.l.b16 %v328
        %v674 = vunpack.c.h.b16 %v328
        %v675 = vunpack.c.l.b16 %v329
        %v676 = vunpack.c.h.b16 %v329
        %v677 = vunpack.c.l.b16 %v330
        %v678 = vunpack.c.h.b16 %v330
        %v679 = vunpack.c.l.b16 %v331
        %v680 = vunpack.c.h.b16 %v331
        %v681 = vunpack.c.l.b16 %v332
        %v682 = vunpack.c.h.b16 %v332
        %v683 = vunpack.c.l.b16 %v333
        %v684 = vunpack.c.h.b16 %v333
        %v685 = vunpack.c.l.b16 %v334
        %v686 = vunpack.c.h.b16 %v334
        %v687 = vunpack.c.l.b16 %v335
        %v688 = vunpack.c.h.b16 %v335
        %v689 = vunpack.c.l.b16 %v336
        %v690 = vunpack.c.h.b16 %v336
        %v691 = vunpack.c.l.b16 %v337
        %v692 = vunpack.c.h.b16 %v337
        %v693 = vunpack.c.l.b16 %v338
        %v694 = vunpack.c.h.b16 %v338
        %v695 = vunpack.c.l.b16 %v339
        %v696 = vunpack.c.h.b16 %v339
        %v697 = vunpack.c.l.b16 %v340
        %v698 = vunpack.c.h.b16 %v340
        %v699 = vunpack.c.l.b16 %v341
        %v700 = vunpack.c.h.b16 %v341
        %v701 = vunpack.c.l.b16 %v342
        %v702 = vunpack.c.h.b16 %v342
        %v703 = vunpack.c.l.b16 %v343
        %v704 = vunpack.c.h.b16 %v343
        %v705 = vunpack.c.l.b16 %v344
        %v706 = vunpack.c.h.b16 %v344
        %v707 = vunpack.c.l.b16 %v345
        %v708 = vunpack.c.h.b16 %v345
        %v709 = vunpack.c.l.b16 %v346
        %v710 = vunpack.c.h.b16 %v346
        %v711 = vunpack.c.l.b16 %v347
        %v712 = vunpack.c.h.b16 %v347
        %v713 = vunpack.c.l.b16 %v348
        %v714 = vunpack.c.h.b16 %v348
        %v715 = vunpack.c.l.b16 %v349
        %v716 = vunpack.c.h.b16 %v349
        %v717 = vunpack.c.l.b16 %v350
        %v718 = vunpack.c.h.b16 %v350
        %v719 = vunpack.c.l.b16 %v351
        %v720 = vunpack.c.h.b16 %v351
        %v721 = vunpack.c.l.b16 %v352
        %v722 = vunpack.c.h.b16 %v352
        %v723 = vunpack.c.l.b16 %v353
        %v724 = vunpack.c.h.b16 %v353
        %v725 = vunpack.c.l.b16 %v354
        %v726 = vunpack.c.h.b16 %v354
        %v727 = vunpack.c.l.b16 %v355
        %v728 = vunpack.c.h.b16 %v355
        %v729 = vunpack.c.l.b16 %v356
        %v730 = vunpack.c.h.b16 %v356
        %v731 = vunpack.c.l.b16 %v357
        %v732 = vunpack.c.h.b16 %v357
        %v733 = vunpack.c.l.b16 %v358
        %v734 = vunpack.c.h.b16 %v358
        %v735 = vunpack.c.l.b16 %v359
        %v736 = vunpack.c.h.b16 %v359
        %v737 = vunpack.c.l.b16 %v360
        %v738 = vunpack.c.h.b16 %v360
        %v739 = vunpack.c.l.b16 %v361
        %v740 = vunpack.c.h.b16 %v361
        %v741 = vunpack.c.l.b16 %v362
        %v742 = vunpack.c.h.b16 %v362
        %v743 = vunpack.c.l.b16 %v363
        %v744 = vunpack.c.h.b16 %v363
        %v745 = vunpack.c.l.b16 %v364
        %v746 = vunpack.c.h.b16 %v364
        %v747 = vunpack.c.l.b16 %v365
        %v748 = vunpack.c.h.b16 %v365
        %v749 = vunpack.c.l.b16 %v366
        %v750 = vunpack.c.h.b16 %v366
        %v751 = vunpack.c.l.b16 %v367
        %v752 = vunpack.c.h.b16 %v367
        %v753 = vunpack.c.l.b16 %v368
        %v754 = vunpack.c.h.b16 %v368
        %v755 = vunpack.c.l.b16 %v369
        %v756 = vunpack.c.h.b16 %v369
        %v757 = vunpack.c.l.b16 %v370
        %v758 = vunpack.c.h.b16 %v370
        %v759 = vunpack.c.l.b16 %v371
        %v760 = vunpack.c.h.b16 %v371
        %v761 = vunpack.c.l.b16 %v372
        %v762 = vunpack.c.h.b16 %v372
        %v763 = vunpack.c.l.b16 %v373
        %v764 = vunpack.c.h.b16 %v373
        %v765 = vunpack.c.l.b16 %v374
        %v766 = vunpack.c.h.b16 %v374
        %v767 = vunpack.c.l.b16 %v375
        %v768 = vunpack.c.h.b16 %v375
        %v769 = vunpack.c.l.b16 %v376
        %v770 = vunpack.c.h.b16 %v376
        %v771 = vunpack.c.l.b16 %v377
        %v772 = vunpack.c.h.b16 %v377
        %v773 = vunpack.c.l.b16 %v378
        %v774 = vunpack.c.h.b16 %v378
        %v775 = vunpack.c.l.b16 %v379
        %v776 = vunpack.c.h.b16 %v379
        %v777 = vunpack.c.l.b16 %v380
        %v778 = vunpack.c.h.b16 %v380
        %v779 = vunpack.c.l.b16 %v381
        %v780 = vunpack.c.h.b16 %v381
        %v781 = vunpack.c.l.b16 %v382
        %v782 = vunpack.c.h.b16 %v382
        %v783 = vunpack.c.l.b16 %v383
        %v784 = vunpack.c.h.b16 %v383
        %v785 = vunpack.c.l.b16 %v384
        %v786 = vunpack.c.h.b16 %v384
        %v787 = vunpack.c.l.b16 %v385
        %v788 = vunpack.c.h.b16 %v385
        %v789 = vunpack.c.l.b16 %v386
        %v790 = vunpack.c.h.b16 %v386
        %v791 = vunpack.c.l.b16 %v387
        %v792 = vunpack.c.h.b16 %v387
        %v793 = vunpack.c.l.b16 %v388
        %v794 = vunpack.c.h.b16 %v388
        %v795 = vunpack.c.l.b16 %v389
        %v796 = vunpack.c.h.b16 %v389
        %v797 = vunpack.c.l.b16 %v390
        %v798 = vunpack.c.h.b16 %v390
        %v799 = vunpack.c.l.b16 %v391
        %v800 = vunpack.c.h.b16 %v391
        %v801 = vunpack.c.l.b16 %v392
        %v802 = vunpack.c.h.b16 %v392
        %v803 = vunpack.c.l.b16 %v393
        %v804 = vunpack.c.h.b16 %v393
        %v805 = vunpack.c.l.b16 %v394
        %v806 = vunpack.c.h.b16 %v394
        %v807 = vunpack.c.l.b16 %v395
        %v808 = vunpack.c.h.b16 %v395
        %v809 = vunpack.c.l.b16 %v396
        %v810 = vunpack.c.h.b16 %v396
        %v811 = vunpack.c.l.b16 %v397
        %v812 = vunpack.c.h.b16 %v397
        %v813 = vunpack.c.l.b16 %v398
        %v814 = vunpack.c.h.b16 %v398
        %v815 = vunpack.c.l.b16 %v399
        %v816 = vunpack.c.h.b16 %v399
        %v817 = vunpack.c.l.b16 %v400
        %v818 = vunpack.c.h.b16 %v400
        %v819 = vunpack.c.l.b16 %v401
        %v820 = vunpack.c.h.b16 %v401
        %v821 = vunpack.c.l.b16 %v402
        %v822 = vunpack.c.h.b16 %v402
        %v823 = vunpack.c.l.b16 %v403
        %v824 = vunpack.c.h.b16 %v403
        %v825 = vunpack.c.l.b16 %v404
        %v826 = vunpack.c.h.b16 %v404
        %v827 = vunpack.c.l.b16 %v405
        %v828 = vunpack.c.h.b16 %v405
        %v829 = vunpack.c.l.b16 %v406
        %v830 = vunpack.c.h.b16 %v406
        %v831 = vunpack.c.l.b16 %v407
        %v832 = vunpack.c.h.b16 %v407
        %v833 = vunpack.c.l.b16 %v408
        %v834 = vunpack.c.h.b16 %v408
        %v835 = vunpack.c.l.b16 %v409
        %v836 = vunpack.c.h.b16 %v409
        %v837 = vunpack.c.l.b16 %v410
        %v838 = vunpack.c.h.b16 %v410
        %v839 = vunpack.c.l.b16 %v411
        %v840 = vunpack.c.h.b16 %v411
        %v841 = vunpack.c.l.b16 %v412
        %v842 = vunpack.c.h.b16 %v412
        %v843 = vunpack.c.l.b16 %v413
        %v844 = vunpack.c.h.b16 %v413
        %v845 = vunpack.c.l.b16 %v414
        %v846 = vunpack.c.h.b16 %v414
        %v847 = vunpack.c.l.b16 %v415
        %v848 = vunpack.c.h.b16 %v415
        %v849 = vunpack.c.l.b16 %v416
        %v850 = vunpack.c.h.b16 %v416
        %v851 = vunpack.c.l.b16 %v417
        %v852 = vunpack.c.h.b16 %v417
        %v853 = vunpack.c.l.b16 %v418
        %v854 = vunpack.c.h.b16 %v418
        %v855 = vunpack.c.l.b16 %v419
        %v856 = vunpack.c.h.b16 %v419
        %v857 = vunpack.c.l.b16 %v420
        %v858 = vunpack.c.h.b16 %v420
        %v859 = vunpack.c.l.b16 %v421
        %v860 = vunpack.c.h.b16 %v421
        %v861 = vunpack.c.l.b16 %v422
        %v862 = vunpack.c.h.b16 %v422
        %v863 = vunpack.c.l.b16 %v423
        %v864 = vunpack.c.h.b16 %v423
        %v865 = vunpack.c.l.b16 %v424
        %v866 = vunpack.c.h.b16 %v424
        %v867 = vunpack.c.l.b16 %v425
        %v868 = vunpack.c.h.b16 %v425
        %v869 = vunpack.c.l.b16 %v426
        %v870 = vunpack.c.h.b16 %v426
        %v871 = vunpack.c.l.b16 %v427
        %v872 = vunpack.c.h.b16 %v427
        %v873 = vunpack.c.l.b16 %v428
        %v874 = vunpack.c.h.b16 %v428
        %v875 = vunpack.c.l.b16 %v429
        %v876 = vunpack.c.h.b16 %v429
        %v877 = vunpack.c.l.b16 %v430
        %v878 = vunpack.c.h.b16 %v430
        %v879 = vunpack.c.l.b16 %v431
        %v880 = vunpack.c.h.b16 %v431
        %v881 = vpack.c.b16 %v643, %v641
        %v882 = vpack.c.b16 %v644, %v642
        %v883 = vpack.c.b16 %v647, %v645
        %v884 = vpack.c.b16 %v648, %v646
        %v885 = vpack.c.b16 %v651, %v649
        %v886 = vpack.c.b16 %v652, %v650
        %v887 = vpack.c.b16 %v655, %v653
        %v888 = vpack.c.b16 %v656, %v654
        %v889 = vpack.c.b16 %v659, %v657
        %v890 = vpack.c.b16 %v660, %v658
        %v891 = vpack.c.b16 %v663, %v661
        %v892 = vpack.c.b16 %v664, %v662
        %v893 = vpack.c.b16 %v667, %v665
        %v894 = vpack.c.b16 %v668, %v666
        %v895 = vpack.c.b16 %v671, %v669
        %v896 = vpack.c.b16 %v672, %v670
        %v897 = vpack.c.b16 %v675, %v673
        %v898 = vpack.c.b16 %v676, %v674
        %v899 = vpack.c.b16 %v679, %v677
        %v900 = vpack.c.b16 %v680, %v678
        %v901 = vpack.c.b16 %v683, %v681
        %v902 = vpack.c.b16 %v684, %v682
        %v903 = vpack.c.b16 %v687, %v685
        %v904 = vpack.c.b16 %v688, %v686
        %v905 = vpack.c.b16 %v691, %v689
        %v906 = vpack.c.b16 %v692, %v690
        %v907 = vpack.c.b16 %v695, %v693
        %v908 = vpack.c.b16 %v696, %v694
        %v909 = vpack.c.b16 %v699, %v697
        %v910 = vpack.c.b16 %v700, %v698
        %v911 = vpack.c.b16 %v703, %v701
        %v912 = vpack.c.b16 %v704, %v702
        %v913 = vpack.c.b16 %v707, %v705
        %v914 = vpack.c.b16 %v708, %v706
        %v915 = vpack.c.b16 %v711, %v709
        %v916 = vpack.c.b16 %v712, %v710
        %v917 = vpack.c.b16 %v715, %v713
        %v918 = vpack.c.b16 %v716, %v714
        %v919 = vpack.c.b16 %v719, %v717
        %v920 = vpack.c.b16 %v720, %v718
        %v921 = vpack.c.b16 %v723, %v721
        %v922 = vpack.c.b16 %v724, %v722
        %v923 = vpack.c.b16 %v727, %v725
        %v924 = vpack.c.b16 %v728, %v726
        %v925 = vpack.c.b16 %v731, %v729
        %v926 = vpack.c.b16 %v732, %v730
        %v927 = vpack.c.b16 %v735, %v733
        %v928 = vpack.c.b16 %v736, %v734
        %v929 = vpack.c.b16 %v739, %v737
        %v930 = vpack.c.b16 %v740, %v738
        %v931 = vpack.c.b16 %v743, %v741
        %v932 = vpack.c.b16 %v744, %v742
        %v933 = vpack.c.b16 %v747, %v745
        %v934 = vpack.c.b16 %v748, %v746
        %v935 = vpack.c.b16 %v751, %v749
        %v936 = vpack.c.b16 %v752, %v750
        %v937 = vpack.c.b16 %v755, %v753
        %v938 = vpack.c.b16 %v756, %v754
        %v939 = vpack.c.b16 %v759, %v757
        %v940 = vpack.c.b16 %v760, %v758
        %v941 = vpack.c.b16 %v763, %v761
        %v942 = vpack.c.b16 %v764, %v762
        %v943 = vpack.c.b16 %v767, %v765
        %v944 = vpack.c.b16 %v768, %v766
        %v945 = vpack.c.b16 %v771, %v769
        %v946 = vpack.c.b16 %v772, %v770
        %v947 = vpack.c.b16 %v775, %v773
        %v948 = vpack.c.b16 %v776, %v774
        %v949 = vpack.c.b16 %v779, %v777
        %v950 = vpack.c.b16 %v780, %v778
        %v951 = vpack.c.b16 %v783, %v781
        %v952 = vpack.c.b16 %v784, %v782
        %v953 = vpack.c.b16 %v787, %v785
        %v954 = vpack.c.b16 %v788, %v786
        %v955 = vpack.c.b16 %v791, %v789
        %v956 = vpack.c.b16 %v792, %v790
        %v957 = vpack.c.b16 %v795, %v793
        %v958 = vpack.c.b16 %v796, %v794
        %v959 = vpack.c.b16 %v799, %v797
        %v960 = vpack.c.b16 %v800, %v798
        %v961 = vpack.c.b16 %v803, %v801
        %v962 = vpack.c.b16 %v804, %v802
        %v963 = vpack.c.b16 %v807, %v805
        %v964 = vpack.c.b16 %v808, %v806
        %v965 = vpack.c.b16 %v811, %v809
        %v966 = vpack.c.b16 %v812, %v810
        %v967 = vpack.c.b16 %v815, %v813
        %v968 = vpack.c.b16 %v816, %v814
        %v969 = vpack.c.b16 %v819, %v817
        %v970 = vpack.c.b16 %v820, %v818
        %v971 = vpack.c.b16 %v823, %v821
        %v972 = vpack.c.b16 %v824, %v822
        %v973 = vpack.c.b16 %v827, %v825
        %v974 = vpack.c.b16 %v828, %v826
        %v975 = vpack.c.b16 %v831, %v829
        %v976 = vpack.c.b16 %v832, %v830
        %v977 = vpack.c.b16 %v835, %v833
        %v978 = vpack.c.b16 %v836, %v834
        %v979 = vpack.c.b16 %v839, %v837
        %v980 = vpack.c.b16 %v840, %v838
        %v981 = vpack.c.b16 %v843, %v841
        %v982 = vpack.c.b16 %v844, %v842
        %v983 = vpack.c.b16 %v847, %v845
        %v984 = vpack.c.b16 %v848, %v846
        %v985 = vpack.c.b16 %v851, %v849
        %v986 = vpack.c.b16 %v852, %v850
        %v987 = vpack.c.b16 %v855, %v853
        %v988 = vpack.c.b16 %v856, %v854
        %v989 = vpack.c.b16 %v859, %v857
        %v990 = vpack.c.b16 %v860, %v858
        %v991 = vpack.c.b16 %v863, %v861
        %v992 = vpack.c.b16 %v864, %v862
        %v993 = vpack.c.b16 %v867, %v865
        %v994 = vpack.c.b16 %v868, %v866
        %v995 = vpack.c.b16 %v871, %v869
        %v996 = vpack.c.b16 %v872, %v870
        %v997 = vpack.c.b16 %v875, %v873
        %v998 = vpack.c.b16 %v876, %v874
        %v999 = vpack.c.b16 %v879, %v877
        %v1000 = vpack.c.b16 %v880, %v878
        %v1122 = vsel %vm481, %v508, 0
        %1124 = vmatprep.subr.bf16.mxu0 %v896
        %1125 = vmatpush1.bf16.msra.mxu0 %v895
        %1126 = vmatprep.subr.bf16.mxu0 %v894
        %1127 = vmatpush1.bf16.msra.mxu0 %v893
        %1128 = vmatprep.subr.bf16.mxu0 %v892
        %1129 = vmatpush1.bf16.msra.mxu0 %v891
        %1130 = vmatprep.subr.bf16.mxu0 %v890
        %1131 = vmatpush1.bf16.msra.mxu0 %v889
        %1132 = vmatprep.subr.bf16.mxu0 %v888
        %1133 = vmatpush1.bf16.msra.mxu0 %v887
        %1134 = vmatprep.subr.bf16.mxu0 %v886
        %1135 = vmatpush1.bf16.msra.mxu0 %v885
        %1136 = vmatprep.subr.bf16.mxu0 %v884
        %1137 = vmatpush1.bf16.msra.mxu0 %v883
        %1138 = vmatprep.subr.bf16.mxu0 %v882
        %1139 = vmatpush1.bf16.msra.mxu0 %v881
        %1140 = vmatprep.subr.bf16.mxu0 %v912
        %1141 = vmatpush2.bf16.msra.mxu0 %v911
        %1142 = vmatprep.subr.bf16.mxu0 %v910
        %1143 = vmatpush2.bf16.msra.mxu0 %v909
        %1144 = vmatprep.subr.bf16.mxu0 %v908
        %1145 = vmatpush2.bf16.msra.mxu0 %v907
        %1146 = vmatprep.subr.bf16.mxu0 %v906
        %1147 = vmatpush2.bf16.msra.mxu0 %v905
        %1148 = vmatprep.subr.bf16.mxu0 %v904
        %1149 = vmatpush2.bf16.msra.mxu0 %v903
        %1150 = vmatprep.subr.bf16.mxu0 %v902
        %1151 = vmatpush2.bf16.msra.mxu0 %v901
        %1152 = vmatprep.subr.bf16.mxu0 %v900
        %1153 = vmatpush2.bf16.msra.mxu0 %v899
        %1154 = vmatprep.subr.bf16.mxu0 %v898
        %1155 = vmatpush2.bf16.msra.mxu0 %v897
        %1156 = vmatprep.mubr.bf16.mxu0 %v502
        %1157 = vmatmul.mubr.bf16.gmra.mxu0 %v501
        %v1158 = vpop.f32.mrf.mxu0
        %v1159 = vadd.f32 %v514, %v1158
        %v1160 = vpop.f32.mrf.mxu0
        %v1161 = vadd.f32 %v518, %v1160
        %v1162 = vpop.f32.mrf.mxu0
        %v1163 = vpop.f32.mrf.mxu0
        %1164 = vdwg.mxu0
        %1165 = vmatprep.subr.bf16.mxu0 %v928
        %1166 = vmatpush1.bf16.msra.mxu0 %v927
        %1167 = vmatprep.subr.bf16.mxu0 %v926
        %1168 = vmatpush1.bf16.msra.mxu0 %v925
        %1169 = vmatprep.subr.bf16.mxu0 %v924
        %1170 = vmatpush1.bf16.msra.mxu0 %v923
        %1171 = vmatprep.subr.bf16.mxu0 %v922
        %1172 = vmatpush1.bf16.msra.mxu0 %v921
        %1173 = vmatprep.subr.bf16.mxu0 %v920
        %1174 = vmatpush1.bf16.msra.mxu0 %v919
        %1175 = vmatprep.subr.bf16.mxu0 %v918
        %1176 = vmatpush1.bf16.msra.mxu0 %v917
        %1177 = vmatprep.subr.bf16.mxu0 %v916
        %1178 = vmatpush1.bf16.msra.mxu0 %v915
        %1179 = vmatprep.subr.bf16.mxu0 %v914
        %1180 = vmatpush1.bf16.msra.mxu0 %v913
        %1181 = vmatprep.subr.bf16.mxu0 %v944
        %1182 = vmatpush2.bf16.msra.mxu0 %v943
        %1183 = vmatprep.subr.bf16.mxu0 %v942
        %1184 = vmatpush2.bf16.msra.mxu0 %v941
        %1185 = vmatprep.subr.bf16.mxu0 %v940
        %1186 = vmatpush2.bf16.msra.mxu0 %v939
        %1187 = vmatprep.subr.bf16.mxu0 %v938
        %1188 = vmatpush2.bf16.msra.mxu0 %v937
        %1189 = vmatprep.subr.bf16.mxu0 %v936
        %1190 = vmatpush2.bf16.msra.mxu0 %v935
        %1191 = vmatprep.subr.bf16.mxu0 %v934
        %1192 = vmatpush2.bf16.msra.mxu0 %v933
        %1193 = vmatprep.subr.bf16.mxu0 %v932
        %1194 = vmatpush2.bf16.msra.mxu0 %v931
        %1195 = vmatprep.subr.bf16.mxu0 %v930
        %1196 = vmatpush2.bf16.msra.mxu0 %v929
        %1197 = vmatprep.mubr.bf16.mxu0 %v504
        %1198 = vmatmul.mubr.bf16.gmra.mxu0 %v503
        %v1199 = vpop.f32.mrf.mxu0
        %v1200 = vadd.f32 %v1159, %v1199
        %v1201 = vpop.f32.mrf.mxu0
        %v1202 = vadd.f32 %v1161, %v1201
        %v1203 = vpop.f32.mrf.mxu0
        %v1204 = vpop.f32.mrf.mxu0
        %1205 = vdwg.mxu0
        %1206 = vmatprep.subr.bf16.mxu0 %v960
        %1207 = vmatpush1.bf16.msra.mxu0 %v959
        %1208 = vmatprep.subr.bf16.mxu0 %v958
        %1209 = vmatpush1.bf16.msra.mxu0 %v957
        %1210 = vmatprep.subr.bf16.mxu0 %v956
        %1211 = vmatpush1.bf16.msra.mxu0 %v955
        %1212 = vmatprep.subr.bf16.mxu0 %v954
        %1213 = vmatpush1.bf16.msra.mxu0 %v953
        %1214 = vmatprep.subr.bf16.mxu0 %v952
        %1215 = vmatpush1.bf16.msra.mxu0 %v951
        %1216 = vmatprep.subr.bf16.mxu0 %v950
        %1217 = vmatpush1.bf16.msra.mxu0 %v949
        %1218 = vmatprep.subr.bf16.mxu0 %v948
        %1219 = vmatpush1.bf16.msra.mxu0 %v947
        %1220 = vmatprep.subr.bf16.mxu0 %v946
        %1221 = vmatpush1.bf16.msra.mxu0 %v945
        %1222 = vmatprep.subr.bf16.mxu0 %v976
        %1223 = vmatpush2.bf16.msra.mxu0 %v975
        %1224 = vmatprep.subr.bf16.mxu0 %v974
        %1225 = vmatpush2.bf16.msra.mxu0 %v973
        %1226 = vmatprep.subr.bf16.mxu0 %v972
        %1227 = vmatpush2.bf16.msra.mxu0 %v971
        %1228 = vmatprep.subr.bf16.mxu0 %v970
        %1229 = vmatpush2.bf16.msra.mxu0 %v969
        %1230 = vmatprep.subr.bf16.mxu0 %v968
        %1231 = vmatpush2.bf16.msra.mxu0 %v967
        %1232 = vmatprep.subr.bf16.mxu0 %v966
        %1233 = vmatpush2.bf16.msra.mxu0 %v965
        %1234 = vmatprep.subr.bf16.mxu0 %v964
        %1235 = vmatpush2.bf16.msra.mxu0 %v963
        %1236 = vmatprep.subr.bf16.mxu0 %v962
        %1237 = vmatpush2.bf16.msra.mxu0 %v961
        %1238 = vmatprep.mubr.bf16.mxu0 %v506
        %1239 = vmatmul.mubr.bf16.gmra.mxu0 %v505
        %v1240 = vpop.f32.mrf.mxu0
        %v1241 = vadd.f32 %v1200, %v1240
        %v1242 = vpop.f32.mrf.mxu0
        %v1243 = vadd.f32 %v1202, %v1242
        %v1244 = vpop.f32.mrf.mxu0
        %v1245 = vpop.f32.mrf.mxu0
        %1246 = vdwg.mxu0
        %1247 = vmatprep.subr.bf16.mxu0 %v992
        %1248 = vmatpush1.bf16.msra.mxu0 %v991
        %1249 = vmatprep.subr.bf16.mxu0 %v990
        %1250 = vmatpush1.bf16.msra.mxu0 %v989
        %1251 = vmatprep.subr.bf16.mxu0 %v988
        %1252 = vmatpush1.bf16.msra.mxu0 %v987
        %1253 = vmatprep.subr.bf16.mxu0 %v986
        %1254 = vmatpush1.bf16.msra.mxu0 %v985
        %1255 = vmatprep.subr.bf16.mxu0 %v984
        %1256 = vmatpush1.bf16.msra.mxu0 %v983
        %1257 = vmatprep.subr.bf16.mxu0 %v982
        %1258 = vmatpush1.bf16.msra.mxu0 %v981
        %1259 = vmatprep.subr.bf16.mxu0 %v980
        %1260 = vmatpush1.bf16.msra.mxu0 %v979
        %1261 = vmatprep.subr.bf16.mxu0 %v978
        %1262 = vmatpush1.bf16.msra.mxu0 %v977
        %1263 = vmatprep.subr.bf16.mxu0 0
        %1264 = vmatpush2.bf16.msra.mxu0 0
        %1265 = vmatprep.subr.bf16.mxu0 0
        %1266 = vmatpush2.bf16.msra.mxu0 0
        %1267 = vmatprep.subr.bf16.mxu0 0
        %1268 = vmatpush2.bf16.msra.mxu0 0
        %1269 = vmatprep.subr.bf16.mxu0 0
        %1270 = vmatpush2.bf16.msra.mxu0 0
        %1271 = vmatprep.subr.bf16.mxu0 %v1000
        %1272 = vmatpush2.bf16.msra.mxu0 %v999
        %1273 = vmatprep.subr.bf16.mxu0 %v998
        %1274 = vmatpush2.bf16.msra.mxu0 %v997
        %1275 = vmatprep.subr.bf16.mxu0 %v996
        %1276 = vmatpush2.bf16.msra.mxu0 %v995
        %1277 = vmatprep.subr.bf16.mxu0 %v994
        %1278 = vmatpush2.bf16.msra.mxu0 %v993
        %1279 = vmatprep.mubr.bf16.mxu0 %v1122
        %1280 = vmatmul.mubr.bf16.gmra.mxu0 %v507
        %v1281 = vpop.f32.mrf.mxu0
        %v1282 = vadd.f32 %v1241, %v1281
        %v1283 = vpop.f32.mrf.mxu0
        %v1284 = vadd.f32 %v1243, %v1283
        %v1285 = vpop.f32.mrf.mxu0
        %v1286 = vpop.f32.mrf.mxu0
        %1287 = vdwg.mxu0
        %v1288 = vmax.f32 %v1282, 0.0
        %v1289 = vmax.f32 %v1284, 0.0
        %v1290 = vld [vmem:[#allocation4] sm:$0xff]
        %v1291 = vld [vmem:[#allocation4 + $0x8] sm:$0xff]
        %v1292 = vld [vmem:[#allocation4 + $0x10] sm:$0xff]
        %v1293 = vld [vmem:[#allocation4 + $0x18] sm:$0xff]
        %v1294 = vld [vmem:[#allocation4 + $0x20] sm:$0xff]
        %v1295 = vld [vmem:[#allocation4 + $0x28] sm:$0xff]
        %v1296 = vld [vmem:[#allocation4 + $0x30] sm:$0xff]
        %v1297 = vld [vmem:[#allocation4 + $0x38] sm:$0xff]
        %v1298 = vld [vmem:[#allocation4 + $0x40] sm:$0xff]
        %v1299 = vld [vmem:[#allocation4 + $0x48] sm:$0xff]
        %v1300 = vld [vmem:[#allocation4 + $0x50] sm:$0xff]
        %v1301 = vld [vmem:[#allocation4 + $0x58] sm:$0xff]
        %v1302 = vld [vmem:[#allocation4 + $0x60] sm:$0xff]
        %v1303 = vld [vmem:[#allocation4 + $0x68] sm:$0xff]
        %v1304 = vld [vmem:[#allocation4 + $0x70] sm:$0xff]
        %v1305 = vld [vmem:[#allocation4 + $0x78] sm:$0xff]
        %v1306 = vld [vmem:[#allocation4 + $0x80] sm:$0xff]
        %v1307 = vld [vmem:[#allocation4 + $0x88] sm:$0xff]
        %v1308 = vld [vmem:[#allocation4 + $0x90] sm:$0xff]
        %v1309 = vld [vmem:[#allocation4 + $0x98] sm:$0xff]
        %v1310 = vld [vmem:[#allocation4 + $0xa0] sm:$0xff]
        %v1311 = vld [vmem:[#allocation4 + $0xa8] sm:$0xff]
        %v1312 = vld [vmem:[#allocation4 + $0xb0] sm:$0xff]
        %v1313 = vld [vmem:[#allocation4 + $0xb8] sm:$0xff]
        %v1314 = vld [vmem:[#allocation4 + $0xc0] sm:$0xff]
        %v1315 = vld [vmem:[#allocation4 + $0xc8] sm:$0xff]
        %v1316 = vld [vmem:[#allocation4 + $0xd0] sm:$0xff]
        %v1317 = vld [vmem:[#allocation4 + $0xd8] sm:$0xff]
        %v1318 = vld [vmem:[#allocation4 + $0xe0] sm:$0xff]
        %v1319 = vld [vmem:[#allocation4 + $0xe8] sm:$0xff]
        %v1320 = vld [vmem:[#allocation4 + $0xf0] sm:$0xff]
        %v1321 = vld [vmem:[#allocation4 + $0xf8] sm:$0xff]
        %v1322 = vld [vmem:[#allocation4 + $0x100] sm:$0xff]
        %v1323 = vld [vmem:[#allocation4 + $0x108] sm:$0xff]
        %v1324 = vld [vmem:[#allocation4 + $0x110] sm:$0xff]
        %v1325 = vld [vmem:[#allocation4 + $0x118] sm:$0xff]
        %v1326 = vld [vmem:[#allocation4 + $0x120] sm:$0xff]
        %v1327 = vld [vmem:[#allocation4 + $0x128] sm:$0xff]
        %v1328 = vld [vmem:[#allocation4 + $0x130] sm:$0xff]
        %v1329 = vld [vmem:[#allocation4 + $0x138] sm:$0xff]
        %v1330 = vld [vmem:[#allocation4 + $0x140] sm:$0xff]
        %v1331 = vld [vmem:[#allocation4 + $0x148] sm:$0xff]
        %v1332 = vld [vmem:[#allocation4 + $0x150] sm:$0xff]
        %v1333 = vld [vmem:[#allocation4 + $0x158] sm:$0xff]
        %v1334 = vld [vmem:[#allocation4 + $0x160] sm:$0xff]
        %v1335 = vld [vmem:[#allocation4 + $0x168] sm:$0xff]
        %v1336 = vld [vmem:[#allocation4 + $0x170] sm:$0xff]
        %v1337 = vld [vmem:[#allocation4 + $0x178] sm:$0xff]
        %v1338 = vld [vmem:[#allocation4 + $0x180] sm:$0xff]
        %v1339 = vld [vmem:[#allocation4 + $0x188] sm:$0xff]
        %v1340 = vld [vmem:[#allocation4 + $0x190] sm:$0xff]
        %v1341 = vld [vmem:[#allocation4 + $0x198] sm:$0xff]
        %v1342 = vld [vmem:[#allocation4 + $0x1a0] sm:$0xff]
        %v1343 = vld [vmem:[#allocation4 + $0x1a8] sm:$0xff]
        %v1344 = vld [vmem:[#allocation4 + $0x1b0] sm:$0xff]
        %v1345 = vld [vmem:[#allocation4 + $0x1b8] sm:$0xff]
        %v1346 = vld [vmem:[#allocation4 + $0x1c0] sm:$0xff]
        %v1347 = vld [vmem:[#allocation4 + $0x1c8] sm:$0xff]
        %v1348 = vld [vmem:[#allocation4 + $0x1d0] sm:$0xff]
        %v1349 = vld [vmem:[#allocation4 + $0x1d8] sm:$0xff]
        %v1350 = vld [vmem:[#allocation4 + $0x1e0] sm:$0xff]
        %v1351 = vld [vmem:[#allocation4 + $0x1e8] sm:$0xff]
        %v1352 = vld [vmem:[#allocation4 + $0x1f0] sm:$0xff]
        %v1353 = vld [vmem:[#allocation4 + $0x1f8] sm:$0xff]
        %v1354 = vld [vmem:[#allocation4 + $0x200] sm:$0xff]
        %v1355 = vld [vmem:[#allocation4 + $0x208] sm:$0xff]
        %v1356 = vld [vmem:[#allocation4 + $0x210] sm:$0xff]
        %v1357 = vld [vmem:[#allocation4 + $0x218] sm:$0xff]
        %v1358 = vld [vmem:[#allocation4 + $0x220] sm:$0xff]
        %v1359 = vld [vmem:[#allocation4 + $0x228] sm:$0xff]
        %v1360 = vld [vmem:[#allocation4 + $0x230] sm:$0xff]
        %v1361 = vld [vmem:[#allocation4 + $0x238] sm:$0xff]
        %v1362 = vld [vmem:[#allocation4 + $0x240] sm:$0xff]
        %v1363 = vld [vmem:[#allocation4 + $0x248] sm:$0xff]
        %v1364 = vld [vmem:[#allocation4 + $0x250] sm:$0xff]
        %v1365 = vld [vmem:[#allocation4 + $0x258] sm:$0xff]
        %v1366 = vld [vmem:[#allocation4 + $0x260] sm:$0xff]
        %v1367 = vld [vmem:[#allocation4 + $0x268] sm:$0xff]
        %v1368 = vld [vmem:[#allocation4 + $0x270] sm:$0xff]
        %v1369 = vld [vmem:[#allocation4 + $0x278] sm:$0xff]
        %v1370 = vld [vmem:[#allocation4 + $0x280] sm:$0xff]
        %v1371 = vld [vmem:[#allocation4 + $0x288] sm:$0xff]
        %v1372 = vld [vmem:[#allocation4 + $0x290] sm:$0xff]
        %v1373 = vld [vmem:[#allocation4 + $0x298] sm:$0xff]
        %v1374 = vld [vmem:[#allocation4 + $0x2a0] sm:$0xff]
        %v1375 = vld [vmem:[#allocation4 + $0x2a8] sm:$0xff]
        %v1376 = vld [vmem:[#allocation4 + $0x2b0] sm:$0xff]
        %v1377 = vld [vmem:[#allocation4 + $0x2b8] sm:$0xff]
        %v1378 = vld [vmem:[#allocation4 + $0x2c0] sm:$0xff]
        %v1379 = vld [vmem:[#allocation4 + $0x2c8] sm:$0xff]
        %v1380 = vld [vmem:[#allocation4 + $0x2d0] sm:$0xff]
        %v1381 = vld [vmem:[#allocation4 + $0x2d8] sm:$0xff]
        %v1382 = vld [vmem:[#allocation4 + $0x2e0] sm:$0xff]
        %v1383 = vld [vmem:[#allocation4 + $0x2e8] sm:$0xff]
        %v1384 = vld [vmem:[#allocation4 + $0x2f0] sm:$0xff]
        %v1385 = vld [vmem:[#allocation4 + $0x2f8] sm:$0xff]
        %v1386 = vld [vmem:[#allocation4 + $0x300] sm:$0xff]
        %v1387 = vld [vmem:[#allocation4 + $0x308] sm:$0xff]
        %v1388 = vld [vmem:[#allocation4 + $0x310] sm:$0xff]
        %v1389 = vld [vmem:[#allocation4 + $0x318] sm:$0xff]
        %v1390 = vld [vmem:[#allocation4 + $0x320] sm:$0xff]
        %v1391 = vld [vmem:[#allocation4 + $0x328] sm:$0xff]
        %v1392 = vld [vmem:[#allocation4 + $0x330] sm:$0xff]
        %v1393 = vld [vmem:[#allocation4 + $0x338] sm:$0xff]
        %v1394 = vld [vmem:[#allocation4 + $0x340] sm:$0xff]
        %v1395 = vld [vmem:[#allocation4 + $0x348] sm:$0xff]
        %v1396 = vld [vmem:[#allocation4 + $0x350] sm:$0xff]
        %v1397 = vld [vmem:[#allocation4 + $0x358] sm:$0xff]
        %v1398 = vld [vmem:[#allocation4 + $0x360] sm:$0xff]
        %v1399 = vld [vmem:[#allocation4 + $0x368] sm:$0xff]
        %v1400 = vld [vmem:[#allocation4 + $0x370] sm:$0xff]
        %v1401 = vld [vmem:[#allocation4 + $0x378] sm:$0xff]
        %v1402 = vld [vmem:[#allocation4 + $0x380] sm:$0xff]
        %v1403 = vld [vmem:[#allocation4 + $0x388] sm:$0xff]
        %v1404 = vld [vmem:[#allocation4 + $0x390] sm:$0xff]
        %v1405 = vld [vmem:[#allocation4 + $0x398] sm:$0xff]
        %v1406 = vld [vmem:[#allocation4 + $0x3a0] sm:$0xff]
        %v1407 = vld [vmem:[#allocation4 + $0x3a8] sm:$0xff]
        %v1408 = vld [vmem:[#allocation4 + $0x3b0] sm:$0xff]
        %v1409 = vld [vmem:[#allocation4 + $0x3b8] sm:$0xff]
        %1412 = vrot.lane.b32.xlu0 %v1288, 32
        %v1413 = vpop.permute.xlu0 %1412
        %1414 = vrot.lane.b32.xlu0 %v1289, 32
        %v1415 = vpop.permute.xlu0 %1414
        %v1416 = vsel %vm438, %v1413, %v1415
        %v1419 = vsel %vm438, 0.0, %v1413
        %v1420 = vsel %vm438, %v1415, 0.0
        %v1423 = vrot.slane %v1419, 7
        %v1424 = vrot.slane %v1416, 7
        %v1425 = vrot.slane %v1420, 7
        %v1429 = vsel %vm452, 0.0, %v1423
        %v1430 = vsel %vm452, 0.0, %v1424
        %v1431 = vsel %vm452, 0.0, %v1425
        %v1432 = vsel %vm452, %v1423, 0.0
        %v1433 = vsel %vm452, %v1424, 0.0
        %v1434 = vsel %vm452, %v1425, 0.0
        %v1441 = vrot.slane %v1429, 1
        %v1442 = vrot.slane %v1432, 1
        %v1443 = vsel %vm465, %v1441, %v1442
        %v1444 = vrot.slane %v1430, 1
        %v1445 = vrot.slane %v1433, 1
        %v1446 = vsel %vm465, %v1444, %v1445
        %v1447 = vrot.slane %v1431, 1
        %v1448 = vrot.slane %v1434, 1
        %v1449 = vsel %vm465, %v1447, %v1448
        %1450 = vrot.lane.b32.xlu0 %v1443, 64
        %v1451 = vpop.permute.xlu0 %1450
        %1452 = vrot.lane.b32.xlu0 %v1446, 64
        %v1453 = vpop.permute.xlu0 %1452
        %1454 = vrot.lane.b32.xlu0 %v1449, 64
        %v1455 = vpop.permute.xlu0 %1454
        %v1456 = vsel %vm481, %v1451, %v1453
        %v1457 = vsel %vm481, %v1453, %v1455
        %v1461 = vrot.slane %v1429, 2
        %v1462 = vrot.slane %v1432, 2
        %v1463 = vsel %vm487, %v1461, %v1462
        %v1464 = vrot.slane %v1430, 2
        %v1465 = vrot.slane %v1433, 2
        %v1466 = vsel %vm487, %v1464, %v1465
        %v1467 = vrot.slane %v1431, 2
        %v1468 = vrot.slane %v1434, 2
        %v1469 = vsel %vm487, %v1467, %v1468
        %v1473 = vsel %vm481, %v1431, %v1451
        %v1474 = vpack.c.bf16 %v1429, %v1429
        %v1475 = vpack.c.bf16 %v1430, %v1430
        %v1476 = vpack.c.bf16 %v1473, %v1473
        %v1477 = vpack.c.bf16 %v1456, %v1456
        %v1478 = vpack.c.bf16 %v1457, %v1457
        %v1479 = vpack.c.bf16 %v1463, %v1463
        %v1480 = vpack.c.bf16 %v1466, %v1466
        %v1481 = vpack.c.bf16 %v1469, %v1469
        %v1482 = vld [vmem:[%s4] sm:$0x3]
        %v1484 = vlaneseq
        %v1485 = vshrl.u32 %v1484, 7
        %v1486 = vsub.s32 0, %v1485
        %v1487 = vrot.slane %v1482, %v1486
        %v1488 = vlaneseq
        %v1489 = vshrl.u32 %v1488, 7
        %v1490 = vsub.s32 1, %v1489
        %v1491 = vrot.slane %v1482, %v1490
        %v1614 = vunpack.c.l.b16 %v1290
        %v1615 = vunpack.c.h.b16 %v1290
        %v1616 = vunpack.c.l.b16 %v1291
        %v1617 = vunpack.c.h.b16 %v1291
        %v1618 = vunpack.c.l.b16 %v1292
        %v1619 = vunpack.c.h.b16 %v1292
        %v1620 = vunpack.c.l.b16 %v1293
        %v1621 = vunpack.c.h.b16 %v1293
        %v1622 = vunpack.c.l.b16 %v1294
        %v1623 = vunpack.c.h.b16 %v1294
        %v1624 = vunpack.c.l.b16 %v1295
        %v1625 = vunpack.c.h.b16 %v1295
        %v1626 = vunpack.c.l.b16 %v1296
        %v1627 = vunpack.c.h.b16 %v1296
        %v1628 = vunpack.c.l.b16 %v1297
        %v1629 = vunpack.c.h.b16 %v1297
        %v1630 = vunpack.c.l.b16 %v1298
        %v1631 = vunpack.c.h.b16 %v1298
        %v1632 = vunpack.c.l.b16 %v1299
        %v1633 = vunpack.c.h.b16 %v1299
        %v1634 = vunpack.c.l.b16 %v1300
        %v1635 = vunpack.c.h.b16 %v1300
        %v1636 = vunpack.c.l.b16 %v1301
        %v1637 = vunpack.c.h.b16 %v1301
        %v1638 = vunpack.c.l.b16 %v1302
        %v1639 = vunpack.c.h.b16 %v1302
        %v1640 = vunpack.c.l.b16 %v1303
        %v1641 = vunpack.c.h.b16 %v1303
        %v1642 = vunpack.c.l.b16 %v1304
        %v1643 = vunpack.c.h.b16 %v1304
        %v1644 = vunpack.c.l.b16 %v1305
        %v1645 = vunpack.c.h.b16 %v1305
        %v1646 = vunpack.c.l.b16 %v1306
        %v1647 = vunpack.c.h.b16 %v1306
        %v1648 = vunpack.c.l.b16 %v1307
        %v1649 = vunpack.c.h.b16 %v1307
        %v1650 = vunpack.c.l.b16 %v1308
        %v1651 = vunpack.c.h.b16 %v1308
        %v1652 = vunpack.c.l.b16 %v1309
        %v1653 = vunpack.c.h.b16 %v1309
        %v1654 = vunpack.c.l.b16 %v1310
        %v1655 = vunpack.c.h.b16 %v1310
        %v1656 = vunpack.c.l.b16 %v1311
        %v1657 = vunpack.c.h.b16 %v1311
        %v1658 = vunpack.c.l.b16 %v1312
        %v1659 = vunpack.c.h.b16 %v1312
        %v1660 = vunpack.c.l.b16 %v1313
        %v1661 = vunpack.c.h.b16 %v1313
        %v1662 = vunpack.c.l.b16 %v1314
        %v1663 = vunpack.c.h.b16 %v1314
        %v1664 = vunpack.c.l.b16 %v1315
        %v1665 = vunpack.c.h.b16 %v1315
        %v1666 = vunpack.c.l.b16 %v1316
        %v1667 = vunpack.c.h.b16 %v1316
        %v1668 = vunpack.c.l.b16 %v1317
        %v1669 = vunpack.c.h.b16 %v1317
        %v1670 = vunpack.c.l.b16 %v1318
        %v1671 = vunpack.c.h.b16 %v1318
        %v1672 = vunpack.c.l.b16 %v1319
        %v1673 = vunpack.c.h.b16 %v1319
        %v1674 = vunpack.c.l.b16 %v1320
        %v1675 = vunpack.c.h.b16 %v1320
        %v1676 = vunpack.c.l.b16 %v1321
        %v1677 = vunpack.c.h.b16 %v1321
        %v1678 = vunpack.c.l.b16 %v1322
        %v1679 = vunpack.c.h.b16 %v1322
        %v1680 = vunpack.c.l.b16 %v1323
        %v1681 = vunpack.c.h.b16 %v1323
        %v1682 = vunpack.c.l.b16 %v1324
        %v1683 = vunpack.c.h.b16 %v1324
        %v1684 = vunpack.c.l.b16 %v1325
        %v1685 = vunpack.c.h.b16 %v1325
        %v1686 = vunpack.c.l.b16 %v1326
        %v1687 = vunpack.c.h.b16 %v1326
        %v1688 = vunpack.c.l.b16 %v1327
        %v1689 = vunpack.c.h.b16 %v1327
        %v1690 = vunpack.c.l.b16 %v1328
        %v1691 = vunpack.c.h.b16 %v1328
        %v1692 = vunpack.c.l.b16 %v1329
        %v1693 = vunpack.c.h.b16 %v1329
        %v1694 = vunpack.c.l.b16 %v1330
        %v1695 = vunpack.c.h.b16 %v1330
        %v1696 = vunpack.c.l.b16 %v1331
        %v1697 = vunpack.c.h.b16 %v1331
        %v1698 = vunpack.c.l.b16 %v1332
        %v1699 = vunpack.c.h.b16 %v1332
        %v1700 = vunpack.c.l.b16 %v1333
        %v1701 = vunpack.c.h.b16 %v1333
        %v1702 = vunpack.c.l.b16 %v1334
        %v1703 = vunpack.c.h.b16 %v1334
        %v1704 = vunpack.c.l.b16 %v1335
        %v1705 = vunpack.c.h.b16 %v1335
        %v1706 = vunpack.c.l.b16 %v1336
        %v1707 = vunpack.c.h.b16 %v1336
        %v1708 = vunpack.c.l.b16 %v1337
        %v1709 = vunpack.c.h.b16 %v1337
        %v1710 = vunpack.c.l.b16 %v1338
        %v1711 = vunpack.c.h.b16 %v1338
        %v1712 = vunpack.c.l.b16 %v1339
        %v1713 = vunpack.c.h.b16 %v1339
        %v1714 = vunpack.c.l.b16 %v1340
        %v1715 = vunpack.c.h.b16 %v1340
        %v1716 = vunpack.c.l.b16 %v1341
        %v1717 = vunpack.c.h.b16 %v1341
        %v1718 = vunpack.c.l.b16 %v1342
        %v1719 = vunpack.c.h.b16 %v1342
        %v1720 = vunpack.c.l.b16 %v1343
        %v1721 = vunpack.c.h.b16 %v1343
        %v1722 = vunpack.c.l.b16 %v1344
        %v1723 = vunpack.c.h.b16 %v1344
        %v1724 = vunpack.c.l.b16 %v1345
        %v1725 = vunpack.c.h.b16 %v1345
        %v1726 = vunpack.c.l.b16 %v1346
        %v1727 = vunpack.c.h.b16 %v1346
        %v1728 = vunpack.c.l.b16 %v1347
        %v1729 = vunpack.c.h.b16 %v1347
        %v1730 = vunpack.c.l.b16 %v1348
        %v1731 = vunpack.c.h.b16 %v1348
        %v1732 = vunpack.c.l.b16 %v1349
        %v1733 = vunpack.c.h.b16 %v1349
        %v1734 = vunpack.c.l.b16 %v1350
        %v1735 = vunpack.c.h.b16 %v1350
        %v1736 = vunpack.c.l.b16 %v1351
        %v1737 = vunpack.c.h.b16 %v1351
        %v1738 = vunpack.c.l.b16 %v1352
        %v1739 = vunpack.c.h.b16 %v1352
        %v1740 = vunpack.c.l.b16 %v1353
        %v1741 = vunpack.c.h.b16 %v1353
        %v1742 = vunpack.c.l.b16 %v1354
        %v1743 = vunpack.c.h.b16 %v1354
        %v1744 = vunpack.c.l.b16 %v1355
        %v1745 = vunpack.c.h.b16 %v1355
        %v1746 = vunpack.c.l.b16 %v1356
        %v1747 = vunpack.c.h.b16 %v1356
        %v1748 = vunpack.c.l.b16 %v1357
        %v1749 = vunpack.c.h.b16 %v1357
        %v1750 = vunpack.c.l.b16 %v1358
        %v1751 = vunpack.c.h.b16 %v1358
        %v1752 = vunpack.c.l.b16 %v1359
        %v1753 = vunpack.c.h.b16 %v1359
        %v1754 = vunpack.c.l.b16 %v1360
        %v1755 = vunpack.c.h.b16 %v1360
        %v1756 = vunpack.c.l.b16 %v1361
        %v1757 = vunpack.c.h.b16 %v1361
        %v1758 = vunpack.c.l.b16 %v1362
        %v1759 = vunpack.c.h.b16 %v1362
        %v1760 = vunpack.c.l.b16 %v1363
        %v1761 = vunpack.c.h.b16 %v1363
        %v1762 = vunpack.c.l.b16 %v1364
        %v1763 = vunpack.c.h.b16 %v1364
        %v1764 = vunpack.c.l.b16 %v1365
        %v1765 = vunpack.c.h.b16 %v1365
        %v1766 = vunpack.c.l.b16 %v1366
        %v1767 = vunpack.c.h.b16 %v1366
        %v1768 = vunpack.c.l.b16 %v1367
        %v1769 = vunpack.c.h.b16 %v1367
        %v1770 = vunpack.c.l.b16 %v1368
        %v1771 = vunpack.c.h.b16 %v1368
        %v1772 = vunpack.c.l.b16 %v1369
        %v1773 = vunpack.c.h.b16 %v1369
        %v1774 = vunpack.c.l.b16 %v1370
        %v1775 = vunpack.c.h.b16 %v1370
        %v1776 = vunpack.c.l.b16 %v1371
        %v1777 = vunpack.c.h.b16 %v1371
        %v1778 = vunpack.c.l.b16 %v1372
        %v1779 = vunpack.c.h.b16 %v1372
        %v1780 = vunpack.c.l.b16 %v1373
        %v1781 = vunpack.c.h.b16 %v1373
        %v1782 = vunpack.c.l.b16 %v1374
        %v1783 = vunpack.c.h.b16 %v1374
        %v1784 = vunpack.c.l.b16 %v1375
        %v1785 = vunpack.c.h.b16 %v1375
        %v1786 = vunpack.c.l.b16 %v1376
        %v1787 = vunpack.c.h.b16 %v1376
        %v1788 = vunpack.c.l.b16 %v1377
        %v1789 = vunpack.c.h.b16 %v1377
        %v1790 = vunpack.c.l.b16 %v1378
        %v1791 = vunpack.c.h.b16 %v1378
        %v1792 = vunpack.c.l.b16 %v1379
        %v1793 = vunpack.c.h.b16 %v1379
        %v1794 = vunpack.c.l.b16 %v1380
        %v1795 = vunpack.c.h.b16 %v1380
        %v1796 = vunpack.c.l.b16 %v1381
        %v1797 = vunpack.c.h.b16 %v1381
        %v1798 = vunpack.c.l.b16 %v1382
        %v1799 = vunpack.c.h.b16 %v1382
        %v1800 = vunpack.c.l.b16 %v1383
        %v1801 = vunpack.c.h.b16 %v1383
        %v1802 = vunpack.c.l.b16 %v1384
        %v1803 = vunpack.c.h.b16 %v1384
        %v1804 = vunpack.c.l.b16 %v1385
        %v1805 = vunpack.c.h.b16 %v1385
        %v1806 = vunpack.c.l.b16 %v1386
        %v1807 = vunpack.c.h.b16 %v1386
        %v1808 = vunpack.c.l.b16 %v1387
        %v1809 = vunpack.c.h.b16 %v1387
        %v1810 = vunpack.c.l.b16 %v1388
        %v1811 = vunpack.c.h.b16 %v1388
        %v1812 = vunpack.c.l.b16 %v1389
        %v1813 = vunpack.c.h.b16 %v1389
        %v1814 = vunpack.c.l.b16 %v1390
        %v1815 = vunpack.c.h.b16 %v1390
        %v1816 = vunpack.c.l.b16 %v1391
        %v1817 = vunpack.c.h.b16 %v1391
        %v1818 = vunpack.c.l.b16 %v1392
        %v1819 = vunpack.c.h.b16 %v1392
        %v1820 = vunpack.c.l.b16 %v1393
        %v1821 = vunpack.c.h.b16 %v1393
        %v1822 = vunpack.c.l.b16 %v1394
        %v1823 = vunpack.c.h.b16 %v1394
        %v1824 = vunpack.c.l.b16 %v1395
        %v1825 = vunpack.c.h.b16 %v1395
        %v1826 = vunpack.c.l.b16 %v1396
        %v1827 = vunpack.c.h.b16 %v1396
        %v1828 = vunpack.c.l.b16 %v1397
        %v1829 = vunpack.c.h.b16 %v1397
        %v1830 = vunpack.c.l.b16 %v1398
        %v1831 = vunpack.c.h.b16 %v1398
        %v1832 = vunpack.c.l.b16 %v1399
        %v1833 = vunpack.c.h.b16 %v1399
        %v1834 = vunpack.c.l.b16 %v1400
        %v1835 = vunpack.c.h.b16 %v1400
        %v1836 = vunpack.c.l.b16 %v1401
        %v1837 = vunpack.c.h.b16 %v1401
        %v1838 = vunpack.c.l.b16 %v1402
        %v1839 = vunpack.c.h.b16 %v1402
        %v1840 = vunpack.c.l.b16 %v1403
        %v1841 = vunpack.c.h.b16 %v1403
        %v1842 = vunpack.c.l.b16 %v1404
        %v1843 = vunpack.c.h.b16 %v1404
        %v1844 = vunpack.c.l.b16 %v1405
        %v1845 = vunpack.c.h.b16 %v1405
        %v1846 = vunpack.c.l.b16 %v1406
        %v1847 = vunpack.c.h.b16 %v1406
        %v1848 = vunpack.c.l.b16 %v1407
        %v1849 = vunpack.c.h.b16 %v1407
        %v1850 = vunpack.c.l.b16 %v1408
        %v1851 = vunpack.c.h.b16 %v1408
        %v1852 = vunpack.c.l.b16 %v1409
        %v1853 = vunpack.c.h.b16 %v1409
        %v1854 = vpack.c.b16 %v1616, %v1614
        %v1855 = vpack.c.b16 %v1617, %v1615
        %v1856 = vpack.c.b16 %v1620, %v1618
        %v1857 = vpack.c.b16 %v1621, %v1619
        %v1858 = vpack.c.b16 %v1624, %v1622
        %v1859 = vpack.c.b16 %v1625, %v1623
        %v1860 = vpack.c.b16 %v1628, %v1626
        %v1861 = vpack.c.b16 %v1629, %v1627
        %v1862 = vpack.c.b16 %v1632, %v1630
        %v1863 = vpack.c.b16 %v1633, %v1631
        %v1864 = vpack.c.b16 %v1636, %v1634
        %v1865 = vpack.c.b16 %v1637, %v1635
        %v1866 = vpack.c.b16 %v1640, %v1638
        %v1867 = vpack.c.b16 %v1641, %v1639
        %v1868 = vpack.c.b16 %v1644, %v1642
        %v1869 = vpack.c.b16 %v1645, %v1643
        %v1870 = vpack.c.b16 %v1648, %v1646
        %v1871 = vpack.c.b16 %v1649, %v1647
        %v1872 = vpack.c.b16 %v1652, %v1650
        %v1873 = vpack.c.b16 %v1653, %v1651
        %v1874 = vpack.c.b16 %v1656, %v1654
        %v1875 = vpack.c.b16 %v1657, %v1655
        %v1876 = vpack.c.b16 %v1660, %v1658
        %v1877 = vpack.c.b16 %v1661, %v1659
        %v1878 = vpack.c.b16 %v1664, %v1662
        %v1879 = vpack.c.b16 %v1665, %v1663
        %v1880 = vpack.c.b16 %v1668, %v1666
        %v1881 = vpack.c.b16 %v1669, %v1667
        %v1882 = vpack.c.b16 %v1672, %v1670
        %v1883 = vpack.c.b16 %v1673, %v1671
        %v1884 = vpack.c.b16 %v1676, %v1674
        %v1885 = vpack.c.b16 %v1677, %v1675
        %v1886 = vpack.c.b16 %v1680, %v1678
        %v1887 = vpack.c.b16 %v1681, %v1679
        %v1888 = vpack.c.b16 %v1684, %v1682
        %v1889 = vpack.c.b16 %v1685, %v1683
        %v1890 = vpack.c.b16 %v1688, %v1686
        %v1891 = vpack.c.b16 %v1689, %v1687
        %v1892 = vpack.c.b16 %v1692, %v1690
        %v1893 = vpack.c.b16 %v1693, %v1691
        %v1894 = vpack.c.b16 %v1696, %v1694
        %v1895 = vpack.c.b16 %v1697, %v1695
        %v1896 = vpack.c.b16 %v1700, %v1698
        %v1897 = vpack.c.b16 %v1701, %v1699
        %v1898 = vpack.c.b16 %v1704, %v1702
        %v1899 = vpack.c.b16 %v1705, %v1703
        %v1900 = vpack.c.b16 %v1708, %v1706
        %v1901 = vpack.c.b16 %v1709, %v1707
        %v1902 = vpack.c.b16 %v1712, %v1710
        %v1903 = vpack.c.b16 %v1713, %v1711
        %v1904 = vpack.c.b16 %v1716, %v1714
        %v1905 = vpack.c.b16 %v1717, %v1715
        %v1906 = vpack.c.b16 %v1720, %v1718
        %v1907 = vpack.c.b16 %v1721, %v1719
        %v1908 = vpack.c.b16 %v1724, %v1722
        %v1909 = vpack.c.b16 %v1725, %v1723
        %v1910 = vpack.c.b16 %v1728, %v1726
        %v1911 = vpack.c.b16 %v1729, %v1727
        %v1912 = vpack.c.b16 %v1732, %v1730
        %v1913 = vpack.c.b16 %v1733, %v1731
        %v1914 = vpack.c.b16 %v1736, %v1734
        %v1915 = vpack.c.b16 %v1737, %v1735
        %v1916 = vpack.c.b16 %v1740, %v1738
        %v1917 = vpack.c.b16 %v1741, %v1739
        %v1918 = vpack.c.b16 %v1744, %v1742
        %v1919 = vpack.c.b16 %v1745, %v1743
        %v1920 = vpack.c.b16 %v1748, %v1746
        %v1921 = vpack.c.b16 %v1749, %v1747
        %v1922 = vpack.c.b16 %v1752, %v1750
        %v1923 = vpack.c.b16 %v1753, %v1751
        %v1924 = vpack.c.b16 %v1756, %v1754
        %v1925 = vpack.c.b16 %v1757, %v1755
        %v1926 = vpack.c.b16 %v1760, %v1758
        %v1927 = vpack.c.b16 %v1761, %v1759
        %v1928 = vpack.c.b16 %v1764, %v1762
        %v1929 = vpack.c.b16 %v1765, %v1763
        %v1930 = vpack.c.b16 %v1768, %v1766
        %v1931 = vpack.c.b16 %v1769, %v1767
        %v1932 = vpack.c.b16 %v1772, %v1770
        %v1933 = vpack.c.b16 %v1773, %v1771
        %v1934 = vpack.c.b16 %v1776, %v1774
        %v1935 = vpack.c.b16 %v1777, %v1775
        %v1936 = vpack.c.b16 %v1780, %v1778
        %v1937 = vpack.c.b16 %v1781, %v1779
        %v1938 = vpack.c.b16 %v1784, %v1782
        %v1939 = vpack.c.b16 %v1785, %v1783
        %v1940 = vpack.c.b16 %v1788, %v1786
        %v1941 = vpack.c.b16 %v1789, %v1787
        %v1942 = vpack.c.b16 %v1792, %v1790
        %v1943 = vpack.c.b16 %v1793, %v1791
        %v1944 = vpack.c.b16 %v1796, %v1794
        %v1945 = vpack.c.b16 %v1797, %v1795
        %v1946 = vpack.c.b16 %v1800, %v1798
        %v1947 = vpack.c.b16 %v1801, %v1799
        %v1948 = vpack.c.b16 %v1804, %v1802
        %v1949 = vpack.c.b16 %v1805, %v1803
        %v1950 = vpack.c.b16 %v1808, %v1806
        %v1951 = vpack.c.b16 %v1809, %v1807
        %v1952 = vpack.c.b16 %v1812, %v1810
        %v1953 = vpack.c.b16 %v1813, %v1811
        %v1954 = vpack.c.b16 %v1816, %v1814
        %v1955 = vpack.c.b16 %v1817, %v1815
        %v1956 = vpack.c.b16 %v1820, %v1818
        %v1957 = vpack.c.b16 %v1821, %v1819
        %v1958 = vpack.c.b16 %v1824, %v1822
        %v1959 = vpack.c.b16 %v1825, %v1823
        %v1960 = vpack.c.b16 %v1828, %v1826
        %v1961 = vpack.c.b16 %v1829, %v1827
        %v1962 = vpack.c.b16 %v1832, %v1830
        %v1963 = vpack.c.b16 %v1833, %v1831
        %v1964 = vpack.c.b16 %v1836, %v1834
        %v1965 = vpack.c.b16 %v1837, %v1835
        %v1966 = vpack.c.b16 %v1840, %v1838
        %v1967 = vpack.c.b16 %v1841, %v1839
        %v1968 = vpack.c.b16 %v1844, %v1842
        %v1969 = vpack.c.b16 %v1845, %v1843
        %v1970 = vpack.c.b16 %v1848, %v1846
        %v1971 = vpack.c.b16 %v1849, %v1847
        %v1972 = vpack.c.b16 %v1852, %v1850
        %v1973 = vpack.c.b16 %v1853, %v1851
        %v2095 = vsel %vm481, %v1481, 0
        %2097 = vmatprep.subr.bf16.mxu0 %v1869
        %2098 = vmatpush1.bf16.msra.mxu0 %v1868
        %2099 = vmatprep.subr.bf16.mxu0 %v1867
        %2100 = vmatpush1.bf16.msra.mxu0 %v1866
        %2101 = vmatprep.subr.bf16.mxu0 %v1865
        %2102 = vmatpush1.bf16.msra.mxu0 %v1864
        %2103 = vmatprep.subr.bf16.mxu0 %v1863
        %2104 = vmatpush1.bf16.msra.mxu0 %v1862
        %2105 = vmatprep.subr.bf16.mxu0 %v1861
        %2106 = vmatpush1.bf16.msra.mxu0 %v1860
        %2107 = vmatprep.subr.bf16.mxu0 %v1859
        %2108 = vmatpush1.bf16.msra.mxu0 %v1858
        %2109 = vmatprep.subr.bf16.mxu0 %v1857
        %2110 = vmatpush1.bf16.msra.mxu0 %v1856
        %2111 = vmatprep.subr.bf16.mxu0 %v1855
        %2112 = vmatpush1.bf16.msra.mxu0 %v1854
        %2113 = vmatprep.subr.bf16.mxu0 %v1885
        %2114 = vmatpush2.bf16.msra.mxu0 %v1884
        %2115 = vmatprep.subr.bf16.mxu0 %v1883
        %2116 = vmatpush2.bf16.msra.mxu0 %v1882
        %2117 = vmatprep.subr.bf16.mxu0 %v1881
        %2118 = vmatpush2.bf16.msra.mxu0 %v1880
        %2119 = vmatprep.subr.bf16.mxu0 %v1879
        %2120 = vmatpush2.bf16.msra.mxu0 %v1878
        %2121 = vmatprep.subr.bf16.mxu0 %v1877
        %2122 = vmatpush2.bf16.msra.mxu0 %v1876
        %2123 = vmatprep.subr.bf16.mxu0 %v1875
        %2124 = vmatpush2.bf16.msra.mxu0 %v1874
        %2125 = vmatprep.subr.bf16.mxu0 %v1873
        %2126 = vmatpush2.bf16.msra.mxu0 %v1872
        %2127 = vmatprep.subr.bf16.mxu0 %v1871
        %2128 = vmatpush2.bf16.msra.mxu0 %v1870
        %2129 = vmatprep.mubr.bf16.mxu0 %v1475
        %2130 = vmatmul.mubr.bf16.gmra.mxu0 %v1474
        %v2131 = vpop.f32.mrf.mxu0
        %v2132 = vadd.f32 %v1487, %v2131
        %v2133 = vpop.f32.mrf.mxu0
        %v2134 = vadd.f32 %v1491, %v2133
        %v2135 = vpop.f32.mrf.mxu0
        %v2136 = vpop.f32.mrf.mxu0
        %2137 = vdwg.mxu0
        %2138 = vmatprep.subr.bf16.mxu0 %v1901
        %2139 = vmatpush1.bf16.msra.mxu0 %v1900
        %2140 = vmatprep.subr.bf16.mxu0 %v1899
        %2141 = vmatpush1.bf16.msra.mxu0 %v1898
        %2142 = vmatprep.subr.bf16.mxu0 %v1897
        %2143 = vmatpush1.bf16.msra.mxu0 %v1896
        %2144 = vmatprep.subr.bf16.mxu0 %v1895
        %2145 = vmatpush1.bf16.msra.mxu0 %v1894
        %2146 = vmatprep.subr.bf16.mxu0 %v1893
        %2147 = vmatpush1.bf16.msra.mxu0 %v1892
        %2148 = vmatprep.subr.bf16.mxu0 %v1891
        %2149 = vmatpush1.bf16.msra.mxu0 %v1890
        %2150 = vmatprep.subr.bf16.mxu0 %v1889
        %2151 = vmatpush1.bf16.msra.mxu0 %v1888
        %2152 = vmatprep.subr.bf16.mxu0 %v1887
        %2153 = vmatpush1.bf16.msra.mxu0 %v1886
        %2154 = vmatprep.subr.bf16.mxu0 %v1917
        %2155 = vmatpush2.bf16.msra.mxu0 %v1916
        %2156 = vmatprep.subr.bf16.mxu0 %v1915
        %2157 = vmatpush2.bf16.msra.mxu0 %v1914
        %2158 = vmatprep.subr.bf16.mxu0 %v1913
        %2159 = vmatpush2.bf16.msra.mxu0 %v1912
        %2160 = vmatprep.subr.bf16.mxu0 %v1911
        %2161 = vmatpush2.bf16.msra.mxu0 %v1910
        %2162 = vmatprep.subr.bf16.mxu0 %v1909
        %2163 = vmatpush2.bf16.msra.mxu0 %v1908
        %2164 = vmatprep.subr.bf16.mxu0 %v1907
        %2165 = vmatpush2.bf16.msra.mxu0 %v1906
        %2166 = vmatprep.subr.bf16.mxu0 %v1905
        %2167 = vmatpush2.bf16.msra.mxu0 %v1904
        %2168 = vmatprep.subr.bf16.mxu0 %v1903
        %2169 = vmatpush2.bf16.msra.mxu0 %v1902
        %2170 = vmatprep.mubr.bf16.mxu0 %v1477
        %2171 = vmatmul.mubr.bf16.gmra.mxu0 %v1476
        %v2172 = vpop.f32.mrf.mxu0
        %v2173 = vadd.f32 %v2132, %v2172
        %v2174 = vpop.f32.mrf.mxu0
        %v2175 = vadd.f32 %v2134, %v2174
        %v2176 = vpop.f32.mrf.mxu0
        %v2177 = vpop.f32.mrf.mxu0
        %2178 = vdwg.mxu0
        %2179 = vmatprep.subr.bf16.mxu0 %v1933
        %2180 = vmatpush1.bf16.msra.mxu0 %v1932
        %2181 = vmatprep.subr.bf16.mxu0 %v1931
        %2182 = vmatpush1.bf16.msra.mxu0 %v1930
        %2183 = vmatprep.subr.bf16.mxu0 %v1929
        %2184 = vmatpush1.bf16.msra.mxu0 %v1928
        %2185 = vmatprep.subr.bf16.mxu0 %v1927
        %2186 = vmatpush1.bf16.msra.mxu0 %v1926
        %2187 = vmatprep.subr.bf16.mxu0 %v1925
        %2188 = vmatpush1.bf16.msra.mxu0 %v1924
        %2189 = vmatprep.subr.bf16.mxu0 %v1923
        %2190 = vmatpush1.bf16.msra.mxu0 %v1922
        %2191 = vmatprep.subr.bf16.mxu0 %v1921
        %2192 = vmatpush1.bf16.msra.mxu0 %v1920
        %2193 = vmatprep.subr.bf16.mxu0 %v1919
        %2194 = vmatpush1.bf16.msra.mxu0 %v1918
        %2195 = vmatprep.subr.bf16.mxu0 %v1949
        %2196 = vmatpush2.bf16.msra.mxu0 %v1948
        %2197 = vmatprep.subr.bf16.mxu0 %v1947
        %2198 = vmatpush2.bf16.msra.mxu0 %v1946
        %2199 = vmatprep.subr.bf16.mxu0 %v1945
        %2200 = vmatpush2.bf16.msra.mxu0 %v1944
        %2201 = vmatprep.subr.bf16.mxu0 %v1943
        %2202 = vmatpush2.bf16.msra.mxu0 %v1942
        %2203 = vmatprep.subr.bf16.mxu0 %v1941
        %2204 = vmatpush2.bf16.msra.mxu0 %v1940
        %2205 = vmatprep.subr.bf16.mxu0 %v1939
        %2206 = vmatpush2.bf16.msra.mxu0 %v1938
        %2207 = vmatprep.subr.bf16.mxu0 %v1937
        %2208 = vmatpush2.bf16.msra.mxu0 %v1936
        %2209 = vmatprep.subr.bf16.mxu0 %v1935
        %2210 = vmatpush2.bf16.msra.mxu0 %v1934
        %2211 = vmatprep.mubr.bf16.mxu0 %v1479
        %2212 = vmatmul.mubr.bf16.gmra.mxu0 %v1478
        %v2213 = vpop.f32.mrf.mxu0
        %v2214 = vadd.f32 %v2173, %v2213
        %v2215 = vpop.f32.mrf.mxu0
        %v2216 = vadd.f32 %v2175, %v2215
        %v2217 = vpop.f32.mrf.mxu0
        %v2218 = vpop.f32.mrf.mxu0
        %2219 = vdwg.mxu0
        %2220 = vmatprep.subr.bf16.mxu0 %v1965
        %2221 = vmatpush1.bf16.msra.mxu0 %v1964
        %2222 = vmatprep.subr.bf16.mxu0 %v1963
        %2223 = vmatpush1.bf16.msra.mxu0 %v1962
        %2224 = vmatprep.subr.bf16.mxu0 %v1961
        %2225 = vmatpush1.bf16.msra.mxu0 %v1960
        %2226 = vmatprep.subr.bf16.mxu0 %v1959
        %2227 = vmatpush1.bf16.msra.mxu0 %v1958
        %2228 = vmatprep.subr.bf16.mxu0 %v1957
        %2229 = vmatpush1.bf16.msra.mxu0 %v1956
        %2230 = vmatprep.subr.bf16.mxu0 %v1955
        %2231 = vmatpush1.bf16.msra.mxu0 %v1954
        %2232 = vmatprep.subr.bf16.mxu0 %v1953
        %2233 = vmatpush1.bf16.msra.mxu0 %v1952
        %2234 = vmatprep.subr.bf16.mxu0 %v1951
        %2235 = vmatpush1.bf16.msra.mxu0 %v1950
        %2236 = vmatprep.subr.bf16.mxu0 0
        %2237 = vmatpush2.bf16.msra.mxu0 0
        %2238 = vmatprep.subr.bf16.mxu0 0
        %2239 = vmatpush2.bf16.msra.mxu0 0
        %2240 = vmatprep.subr.bf16.mxu0 0
        %2241 = vmatpush2.bf16.msra.mxu0 0
        %2242 = vmatprep.subr.bf16.mxu0 0
        %2243 = vmatpush2.bf16.msra.mxu0 0
        %2244 = vmatprep.subr.bf16.mxu0 %v1973
        %2245 = vmatpush2.bf16.msra.mxu0 %v1972
        %2246 = vmatprep.subr.bf16.mxu0 %v1971
        %2247 = vmatpush2.bf16.msra.mxu0 %v1970
        %2248 = vmatprep.subr.bf16.mxu0 %v1969
        %2249 = vmatpush2.bf16.msra.mxu0 %v1968
        %2250 = vmatprep.subr.bf16.mxu0 %v1967
        %2251 = vmatpush2.bf16.msra.mxu0 %v1966
        %2252 = vmatprep.mubr.bf16.mxu0 %v2095
        %2253 = vmatmul.mubr.bf16.gmra.mxu0 %v1480
        %v2254 = vpop.f32.mrf.mxu0
        %v2255 = vadd.f32 %v2214, %v2254
        %v2256 = vpop.f32.mrf.mxu0
        %v2257 = vadd.f32 %v2216, %v2256
        %v2258 = vpop.f32.mrf.mxu0
        %v2259 = vpop.f32.mrf.mxu0
        %2260 = vdwg.mxu0
        %v2261 = vmax.f32 %v2255, 0.0
        %v2262 = vmax.f32 %v2257, 0.0
        %v2263 = vld [vmem:[%s5] sm:$0x3]
        %v2265 = vlaneseq
        %v2266 = vshrl.u32 %v2265, 7
        %v2267 = vsub.s32 0, %v2266
        %v2268 = vrot.slane %v2263, %v2267
        %v2269 = vlaneseq
        %v2270 = vshrl.u32 %v2269, 7
        %v2271 = vsub.s32 1, %v2270
        %v2272 = vrot.slane %v2263, %v2271
        %v2275 = vmul.f32 %v2261, %v2268
        %v2276 = vmul.f32 %v2262, %v2272
        %v2277 = vld [vmem:[%s6] sm:$0x3]
        %v2279 = vlaneseq
        %v2280 = vshrl.u32 %v2279, 7
        %v2281 = vsub.s32 0, %v2280
        %v2282 = vrot.slane %v2277, %v2281
        %v2283 = vlaneseq
        %v2284 = vshrl.u32 %v2283, 7
        %v2285 = vsub.s32 1, %v2284
        %v2286 = vrot.slane %v2277, %v2285
        %v2289 = vadd.f32 %v2275, %v2282
        %v2290 = vadd.f32 %v2276, %v2286
        %2291 = vst [vmem:[%s308] sm:$0xff] %v2289
        %2292 = vst [vmem:[%s308 + $0x8] sm:$0xff] %v2290
        %p2293 = scmp.lt.s32.totalorder %s20, 1
        %s2294 = scalar_select %p2293, %s20, 1
        %s2295 = smul.addr %s2294, 2
        %s2296 = smul.addr %s2295, 8
        %s2297 = scalar_lea.vmem %s7, %s2296
        // Predicated region
        $region57: #{goat_mlp_forward.2} parent=47 // pred_check
          %p2298 = pneg %p190
        $region58: #{goat_mlp_forward.2} parent=47 // pred_check_branch
          %2300 = sbr.rel (%p2298) target = $region60
        $region59: #{goat_mlp_forward.2} parent=47 // pred_region
          _
        $region60: #{goat_mlp_forward.2} parent=47 // pred_fallthru
          _
      $region48: #{goat_mlp_forward.2} parent=5 // pred_fallthru
        _
      %p2301 = scmp.le.s32.totalorder 2, %s15
      // Predicated region
      $region61: #{goat_mlp_forward.2} parent=5 // pred_check
        %p2302 = pneg %p2301
      $region62: #{goat_mlp_forward.2} parent=5 // pred_check_branch
        %2304 = sbr.rel (%p2302) target = $region64
      $region63: #{goat_mlp_forward.2} parent=5 // pred_region
        %s2305 = ssub.s32 %s15, 2
        // Predicated region
        $region65: #{goat_mlp_forward.2} parent=63 // pred_check
          %p2306 = pneg %p196
        $region66: #{goat_mlp_forward.2} parent=63 // pred_check_branch
          %2308 = sbr.rel (%p2306) target = $region68
        $region67: #{goat_mlp_forward.2} parent=63 // pred_region
          %p2309 = scmp.lt.s32.totalorder %s21, 1
          %s2310 = scalar_select %p2309, %s21, 1
          %s2311 = smul.addr %s2310, 2
          %s2312 = smul.addr %s2311, 8
          %s2313 = scalar_lea.vmem %s7, %s2312
        $region68: #{goat_mlp_forward.2} parent=63 // pred_fallthru
          _
      $region64: #{goat_mlp_forward.2} parent=5 // pred_fallthru
        _
    $region6: #{goat_mlp_forward.2} parent=1 // loop_footer
      %s19 = sadd.s32 1, %s15
    $region7: #{goat_mlp_forward.2} parent=1 // loop_footer_branch
      %14 = sbr.rel target = $region3
    $region8: #{goat_mlp_forward.2} parent=1 // loop_exit
      _
    %2314 = vsyncpa [#allocation3], 1
    %s2315 = scalar_lea.sflag [#allocation3], 1
    %2316 = vsyncpa %s2315, 1
    %2317 = vsyncpa [#allocation5], 1

</llo_original>
